<compile_context>
chip_gen: v7x
topology: tpu7x:2x2x1
jax: 0.10.0
libtpu: 0.0.40
codegen_flags: <defaults>
</compile_context>

<pallas_src>
import math
from functools import partial

import jax
import jax.numpy as jnp
import numpy as np
from jax.experimental import pallas as pl


# -----------------------------------------------------------------------------
# Fused kernel: all LSTM layers + FC head, no grid, everything VMEM-resident.
# -----------------------------------------------------------------------------
def make_fused_kernel(num_layers, T, B, H):
    def kernel(*refs):
        # refs: x_ref, [wih_t, whh_t, bias] * num_layers,
        #       fw1, fb1, fw2, fb2, fw3, fb3, o_ref
        x_ref = refs[0]
        lstm_refs = refs[1:1 + 3 * num_layers]
        (fw1_ref, fb1_ref, fw2_ref, fb2_ref,
         fw3_ref, fb3_ref, o_ref) = refs[1 + 3 * num_layers:]

        # (T, B, D) -> (T*B, D); leading-dim merge only, layout-free.
        cur = x_ref[...].astype(jnp.float32).reshape(T * B, -1)

        outs = None
        for layer in range(num_layers):
            # Hoist loop-invariant weight/bias loads out of the timestep loop.
            wih = lstm_refs[3 * layer][...]      # (D_in, 4H)
            whh = lstm_refs[3 * layer + 1][...]  # (H, 4H)
            bias = lstm_refs[3 * layer + 2][...] # (1, 4H)

            # One big input projection for all timesteps of this layer.
            pre = jnp.dot(cur, wih, preferred_element_type=jnp.float32) + bias  # (T*B, 4H)

            h = jnp.zeros((B, H), jnp.float32)
            c = jnp.zeros((B, H), jnp.float32)
            outs = []
            for t in range(T):  # T is small & static -> fully unrolled
                gates = (pre[t * B:(t + 1) * B]
                         + jnp.dot(h, whh, preferred_element_type=jnp.float32))
                i_g = jax.nn.sigmoid(gates[:, 0 * H:1 * H])
                f_g = jax.nn.sigmoid(gates[:, 1 * H:2 * H])
                g_g = jnp.tanh(gates[:, 2 * H:3 * H])
                o_g = jax.nn.sigmoid(gates[:, 3 * H:4 * H])
                c = f_g * c + i_g * g_g
                h = o_g * jnp.tanh(c)
                outs.append(h)

            # Feed next layer (dead/DCE'd for the last layer).
            cur = jnp.concatenate(outs, axis=0)   # (T*B, H), time-major rows

        # lstm_out[-1] in batch_first = last batch row over all timesteps: (T, H).
        # .view(batch_size, -1) with T == B gives the (B, H) head input.
        z = jnp.concatenate([o[B - 1:B, :] for o in outs], axis=0)  # (T, H) == (B, H)

        # FC head. BatchNorm is folded into fw1/fb1 at prep time.
        # TODO(synk): Dropout(0.3) is identity here (inference mode); training-mode
        # stochastic masking is not reproduced.
        h1 = jnp.maximum(
            jnp.dot(z, fw1_ref[...], preferred_element_type=jnp.float32) + fb1_ref[...], 0.0)
        h2 = jnp.maximum(
            jnp.dot(h1, fw2_ref[...], preferred_element_type=jnp.float32) + fb2_ref[...], 0.0)
        y = jnp.dot(h2, fw3_ref[...], preferred_element_type=jnp.float32) + fb3_ref[...]
        o_ref[...] = y.astype(o_ref.dtype)

    return kernel


# -----------------------------------------------------------------------------
# One-time parameter preparation (transposes, bias sums, BN folding).
# -----------------------------------------------------------------------------
def prepare_params(params):
    prepped = {"lstm": [], "fc": None}
    for (wih, whh, bih, bhh) in params["lstm"]:
        prepped["lstm"].append((
            jnp.transpose(wih),                 # (D_in, 4H)
            jnp.transpose(whh),                 # (H, 4H)
            (bih + bhh).reshape(1, -1),         # (1, 4H)
        ))

    gamma = params["fc"]["gamma"]
    beta = params["fc"]["beta"]
    w1, b1 = params["fc"]["lin1"]
    w2, b2 = params["fc"]["lin2"]
    w3, b3 = params["fc"]["lin3"]

    # BatchNorm1d eval mode (running_mean=0, running_var=1) folded into Linear1.
    inv_std = (1.0 + 1e-5) ** -0.5
    w1t = jnp.transpose(w1)                                   # (H, H/2)
    fw1 = (gamma * inv_std)[:, None] * w1t                    # (H, H/2)
    fb1 = (beta @ w1t + b1).reshape(1, -1)                    # (1, H/2)
    prepped["fc"] = (fw1, fb1,
                     jnp.transpose(w2), b2.reshape(1, -1),
                     jnp.transpose(w3), b3.reshape(1, -1))
    return prepped


# -----------------------------------------------------------------------------
# Full forward (matches SimpleLstm.forward with fresh zero hidden state)
# -----------------------------------------------------------------------------
@partial(jax.jit, static_argnums=2)
def simple_lstm_forward(x_bf, prepped, hidden):
    """x_bf: (B, T, D) batch_first, as in the PyTorch module."""
    B, T, D = x_bf.shape
    H = hidden
    assert T == B, "module's .view(batch_size, -1) requires seq_len == batch_size"

    x_tm = jnp.transpose(x_bf, (1, 0, 2))       # (T, B, D) time-major

    lstm_flat = []
    for (wih_t, whh_t, brow) in prepped["lstm"]:
        lstm_flat += [wih_t, whh_t, brow]
    fw1, fb1, fw2, fb2, fw3, fb3 = prepped["fc"]
    O = fb3.shape[1]

    kernel = make_fused_kernel(len(prepped["lstm"]), T, B, H)
    return pl.pallas_call(
        kernel,
        out_shape=jax.ShapeDtypeStruct((B, O), jnp.float32),
    )(x_tm, *lstm_flat, fw1, fb1, fw2, fb2, fw3, fb3)


# -----------------------------------------------------------------------------
# Parameter init (deterministic, PyTorch-style uniform fan-in init)
# -----------------------------------------------------------------------------
def init_params(key, input_dim, hidden, output, num_layers):
    params = {"lstm": [], "fc": {}}
    k = key
    bound_l = 1.0 / math.sqrt(hidden)
    for layer in range(num_layers):
        d_in = input_dim if layer == 0 else hidden
        k, k1, k2, k3, k4 = jax.random.split(k, 5)
        wih = jax.random.uniform(k1, (4 * hidden, d_in), jnp.float32, -bound_l, bound_l)
        whh = jax.random.uniform(k2, (4 * hidden, hidden), jnp.float32, -bound_l, bound_l)
        bih = jax.random.uniform(k3, (4 * hidden,), jnp.float32, -bound_l, bound_l)
        bhh = jax.random.uniform(k4, (4 * hidden,), jnp.float32, -bound_l, bound_l)
        params["lstm"].append((wih, whh, bih, bhh))

    def linear(key, fan_in, fan_out):
        b = 1.0 / math.sqrt(fan_in)
        k1, k2 = jax.random.split(key)
        w = jax.random.uniform(k1, (fan_out, fan_in), jnp.float32, -b, b)
        bias = jax.random.uniform(k2, (fan_out,), jnp.float32, -b, b)
        return w, bias

    k, kf1, kf2, kf3 = jax.random.split(k, 4)
    params["fc"]["gamma"] = jnp.ones((hidden,), jnp.float32)   # BN default weight
    params["fc"]["beta"] = jnp.zeros((hidden,), jnp.float32)   # BN default bias
    params["fc"]["lin1"] = linear(kf1, hidden, hidden // 2)
    params["fc"]["lin2"] = linear(kf2, hidden // 2, hidden // 4)
    params["fc"]["lin3"] = linear(kf3, hidden // 4, output)
    return params


# -----------------------------------------------------------------------------
# Pure-JAX reference for verification
# -----------------------------------------------------------------------------
def reference_forward(x_bf, params, hidden):
    B, T, D = x_bf.shape
    cur = x_bf
    for (wih, whh, bih, bhh) in params["lstm"]:
        h = jnp.zeros((B, hidden), jnp.float32)
        c = jnp.zeros((B, hidden), jnp.float32)

        def step(carry, xt, wih=wih, whh=whh, bih=bih, bhh=bhh):
            h, c = carry
            gates = xt @ wih.T + bih + h @ whh.T + bhh
            i, f, g, o = jnp.split(gates, 4, axis=-1)
            i, f, o = jax.nn.sigmoid(i), jax.nn.sigmoid(f), jax.nn.sigmoid(o)
            g = jnp.tanh(g)
            c = f * c + i * g
            h = o * jnp.tanh(c)
            return (h, c), h

        (_, _), hs = jax.lax.scan(step, (h, c), jnp.swapaxes(cur, 0, 1))
        cur = jnp.swapaxes(hs, 0, 1)                   # (B, T, H)

    feat = cur[-1]                                     # (T, H)
    z = feat.reshape(B, -1)
    inv_std = (1.0 + 1e-5) ** -0.5
    zn = z * (params["fc"]["gamma"] * inv_std) + params["fc"]["beta"]
    w1, b1 = params["fc"]["lin1"]
    w2, b2 = params["fc"]["lin2"]
    w3, b3 = params["fc"]["lin3"]
    h1 = jnp.maximum(zn @ w1.T + b1, 0.0)
    h2 = jnp.maximum(h1 @ w2.T + b2, 0.0)
    return h2 @ w3.T + b3


if __name__ == "__main__":
    # Module hyperparameters (seq_len must equal batch_size for the .view quirk)
    INPUT_DIM = 16
    HIDDEN = 32
    OUTPUT = 4
    NUM_LAYERS = 2
    BATCH = 8
    SEQ = BATCH

    key = jax.random.PRNGKey(0)
    k_x, k_p = jax.random.split(key)
    x = jax.random.normal(k_x, (BATCH, SEQ, INPUT_DIM), jnp.float32)
    params = init_params(k_p, INPUT_DIM, HIDDEN, OUTPUT, NUM_LAYERS)
    prepped = prepare_params(params)   # one-time transposes / BN folding

    y = simple_lstm_forward(x, prepped, HIDDEN)
    y = jax.block_until_ready(y)

    y_ref = jax.block_until_ready(reference_forward(x, params, HIDDEN))
    np.testing.assert_allclose(np.asarray(y), np.asarray(y_ref), rtol=1e-4, atol=1e-4)

    print("KERNEL_OK")
</pallas_src>

<mosaic_0001>
module attributes {stable_mosaic.version = 11 : i64} {
  func.func @kernel(%arg0: memref<8x8x16xf32, #tpu.memory_space<vmem>>, %arg1: memref<16x128xf32, #tpu.memory_space<vmem>>, %arg2: memref<32x128xf32, #tpu.memory_space<vmem>>, %arg3: memref<1x128xf32, #tpu.memory_space<vmem>>, %arg4: memref<32x128xf32, #tpu.memory_space<vmem>>, %arg5: memref<32x128xf32, #tpu.memory_space<vmem>>, %arg6: memref<1x128xf32, #tpu.memory_space<vmem>>, %arg7: memref<32x16xf32, #tpu.memory_space<vmem>>, %arg8: memref<1x16xf32, #tpu.memory_space<vmem>>, %arg9: memref<16x8xf32, #tpu.memory_space<vmem>>, %arg10: memref<1x8xf32, #tpu.memory_space<vmem>>, %arg11: memref<8x4xf32, #tpu.memory_space<vmem>>, %arg12: memref<1x4xf32, #tpu.memory_space<vmem>>, %arg13: memref<8x4xf32, #tpu.memory_space<vmem>>) attributes {dimension_semantics = [], scalar_prefetch = 0 : i64, scratch_operands = 0 : i64, tpu.core_type = #tpu.core_type<tc>} {
    %c0 = arith.constant 0 : index
    %c0_0 = arith.constant 0 : index
    %c0_1 = arith.constant 0 : index
    %0 = vector.load %arg0[%c0, %c0_0, %c0_1] : memref<8x8x16xf32, #tpu.memory_space<vmem>>, vector<8x8x16xf32>
    %1 = vector.shape_cast %0 : vector<8x8x16xf32> to vector<64x16xf32>
    %c0_2 = arith.constant 0 : index
    %c0_3 = arith.constant 0 : index
    %2 = vector.load %arg1[%c0_2, %c0_3] : memref<16x128xf32, #tpu.memory_space<vmem>>, vector<16x128xf32>
    %c0_4 = arith.constant 0 : index
    %c0_5 = arith.constant 0 : index
    %3 = vector.load %arg2[%c0_4, %c0_5] : memref<32x128xf32, #tpu.memory_space<vmem>>, vector<32x128xf32>
    %c0_6 = arith.constant 0 : index
    %c0_7 = arith.constant 0 : index
    %4 = vector.load %arg3[%c0_6, %c0_7] : memref<1x128xf32, #tpu.memory_space<vmem>>, vector<1x128xf32>
    %cst = arith.constant dense<0.000000e+00> : vector<64x128xf32>
    %5 = tpu.matmul %1, %2, %cst {dimension_numbers = #tpu.dot_dimension_numbers<[1], [0], [0], [1], [0, 0, 1, 1], [], []>} : vector<64x16xf32>, vector<16x128xf32>, vector<64x128xf32> -> vector<64x128xf32>
    %6 = vector.broadcast %4 : vector<1x128xf32> to vector<64x128xf32>
    %7 = arith.addf %5, %6 : vector<64x128xf32>
    %cst_8 = arith.constant 0.000000e+00 : f32
    %8 = vector.broadcast %cst_8 : f32 to vector<8x32xf32>
    %cst_9 = arith.constant 0.000000e+00 : f32
    %9 = vector.broadcast %cst_9 : f32 to vector<8x32xf32>
    %10 = vector.extract_strided_slice %7 {offsets = [0, 0], sizes = [8, 128], strides = [1, 1]} : vector<64x128xf32> to vector<8x128xf32>
    %cst_10 = arith.constant dense<0.000000e+00> : vector<8x128xf32>
    %11 = tpu.matmul %8, %3, %cst_10 {dimension_numbers = #tpu.dot_dimension_numbers<[1], [0], [0], [1], [0, 0, 1, 1], [], []>} : vector<8x32xf32>, vector<32x128xf32>, vector<8x128xf32> -> vector<8x128xf32>
    %12 = arith.addf %10, %11 : vector<8x128xf32>
    %13 = vector.extract_strided_slice %12 {offsets = [0, 0], sizes = [8, 32], strides = [1, 1]} : vector<8x128xf32> to vector<8x32xf32>
    %14 = arith.negf %13 : vector<8x32xf32>
    %15 = math.exp %14 : vector<8x32xf32>
    %cst_11 = arith.constant 1.000000e+00 : f32
    %16 = vector.broadcast %cst_11 : f32 to vector<8x32xf32>
    %17 = arith.addf %16, %15 : vector<8x32xf32>
    %18 = arith.divf %16, %17 : vector<8x32xf32>
    %19 = vector.extract_strided_slice %12 {offsets = [0, 32], sizes = [8, 32], strides = [1, 1]} : vector<8x128xf32> to vector<8x32xf32>
    %20 = arith.negf %19 : vector<8x32xf32>
    %21 = math.exp %20 : vector<8x32xf32>
    %cst_12 = arith.constant 1.000000e+00 : f32
    %22 = vector.broadcast %cst_12 : f32 to vector<8x32xf32>
    %23 = arith.addf %22, %21 : vector<8x32xf32>
    %24 = arith.divf %22, %23 : vector<8x32xf32>
    %25 = vector.extract_strided_slice %12 {offsets = [0, 64], sizes = [8, 32], strides = [1, 1]} : vector<8x128xf32> to vector<8x32xf32>
    %26 = math.tanh %25 : vector<8x32xf32>
    %27 = vector.extract_strided_slice %12 {offsets = [0, 96], sizes = [8, 32], strides = [1, 1]} : vector<8x128xf32> to vector<8x32xf32>
    %28 = arith.negf %27 : vector<8x32xf32>
    %29 = math.exp %28 : vector<8x32xf32>
    %cst_13 = arith.constant 1.000000e+00 : f32
    %30 = vector.broadcast %cst_13 : f32 to vector<8x32xf32>
    %31 = arith.addf %30, %29 : vector<8x32xf32>
    %32 = arith.divf %30, %31 : vector<8x32xf32>
    %33 = arith.mulf %24, %9 : vector<8x32xf32>
    %34 = arith.mulf %18, %26 : vector<8x32xf32>
    %35 = arith.addf %33, %34 : vector<8x32xf32>
    %36 = math.tanh %35 : vector<8x32xf32>
    %37 = arith.mulf %32, %36 : vector<8x32xf32>
    %38 = vector.extract_strided_slice %7 {offsets = [8, 0], sizes = [8, 128], strides = [1, 1]} : vector<64x128xf32> to vector<8x128xf32>
    %cst_14 = arith.constant dense<0.000000e+00> : vector<8x128xf32>
    %39 = tpu.matmul %37, %3, %cst_14 {dimension_numbers = #tpu.dot_dimension_numbers<[1], [0], [0], [1], [0, 0, 1, 1], [], []>} : vector<8x32xf32>, vector<32x128xf32>, vector<8x128xf32> -> vector<8x128xf32>
    %40 = arith.addf %38, %39 : vector<8x128xf32>
    %41 = vector.extract_strided_slice %40 {offsets = [0, 0], sizes = [8, 32], strides = [1, 1]} : vector<8x128xf32> to vector<8x32xf32>
    %42 = arith.negf %41 : vector<8x32xf32>
    %43 = math.exp %42 : vector<8x32xf32>
    %cst_15 = arith.constant 1.000000e+00 : f32
    %44 = vector.broadcast %cst_15 : f32 to vector<8x32xf32>
    %45 = arith.addf %44, %43 : vector<8x32xf32>
    %46 = arith.divf %44, %45 : vector<8x32xf32>
    %47 = vector.extract_strided_slice %40 {offsets = [0, 32], sizes = [8, 32], strides = [1, 1]} : vector<8x128xf32> to vector<8x32xf32>
    %48 = arith.negf %47 : vector<8x32xf32>
    %49 = math.exp %48 : vector<8x32xf32>
    %cst_16 = arith.constant 1.000000e+00 : f32
    %50 = vector.broadcast %cst_16 : f32 to vector<8x32xf32>
    %51 = arith.addf %50, %49 : vector<8x32xf32>
    %52 = arith.divf %50, %51 : vector<8x32xf32>
    %53 = vector.extract_strided_slice %40 {offsets = [0, 64], sizes = [8, 32], strides = [1, 1]} : vector<8x128xf32> to vector<8x32xf32>
    %54 = math.tanh %53 : vector<8x32xf32>
    %55 = vector.extract_strided_slice %40 {offsets = [0, 96], sizes = [8, 32], strides = [1, 1]} : vector<8x128xf32> to vector<8x32xf32>
    %56 = arith.negf %55 : vector<8x32xf32>
    %57 = math.exp %56 : vector<8x32xf32>
    %cst_17 = arith.constant 1.000000e+00 : f32
    %58 = vector.broadcast %cst_17 : f32 to vector<8x32xf32>
    %59 = arith.addf %58, %57 : vector<8x32xf32>
    %60 = arith.divf %58, %59 : vector<8x32xf32>
    %61 = arith.mulf %52, %35 : vector<8x32xf32>
    %62 = arith.mulf %46, %54 : vector<8x32xf32>
    %63 = arith.addf %61, %62 : vector<8x32xf32>
    %64 = math.tanh %63 : vector<8x32xf32>
    %65 = arith.mulf %60, %64 : vector<8x32xf32>
    %66 = vector.extract_strided_slice %7 {offsets = [16, 0], sizes = [8, 128], strides = [1, 1]} : vector<64x128xf32> to vector<8x128xf32>
    %cst_18 = arith.constant dense<0.000000e+00> : vector<8x128xf32>
    %67 = tpu.matmul %65, %3, %cst_18 {dimension_numbers = #tpu.dot_dimension_numbers<[1], [0], [0], [1], [0, 0, 1, 1], [], []>} : vector<8x32xf32>, vector<32x128xf32>, vector<8x128xf32> -> vector<8x128xf32>
    %68 = arith.addf %66, %67 : vector<8x128xf32>
    %69 = vector.extract_strided_slice %68 {offsets = [0, 0], sizes = [8, 32], strides = [1, 1]} : vector<8x128xf32> to vector<8x32xf32>
    %70 = arith.negf %69 : vector<8x32xf32>
    %71 = math.exp %70 : vector<8x32xf32>
    %cst_19 = arith.constant 1.000000e+00 : f32
    %72 = vector.broadcast %cst_19 : f32 to vector<8x32xf32>
    %73 = arith.addf %72, %71 : vector<8x32xf32>
    %74 = arith.divf %72, %73 : vector<8x32xf32>
    %75 = vector.extract_strided_slice %68 {offsets = [0, 32], sizes = [8, 32], strides = [1, 1]} : vector<8x128xf32> to vector<8x32xf32>
    %76 = arith.negf %75 : vector<8x32xf32>
    %77 = math.exp %76 : vector<8x32xf32>
    %cst_20 = arith.constant 1.000000e+00 : f32
    %78 = vector.broadcast %cst_20 : f32 to vector<8x32xf32>
    %79 = arith.addf %78, %77 : vector<8x32xf32>
    %80 = arith.divf %78, %79 : vector<8x32xf32>
    %81 = vector.extract_strided_slice %68 {offsets = [0, 64], sizes = [8, 32], strides = [1, 1]} : vector<8x128xf32> to vector<8x32xf32>
    %82 = math.tanh %81 : vector<8x32xf32>
    %83 = vector.extract_strided_slice %68 {offsets = [0, 96], sizes = [8, 32], strides = [1, 1]} : vector<8x128xf32> to vector<8x32xf32>
    %84 = arith.negf %83 : vector<8x32xf32>
    %85 = math.exp %84 : vector<8x32xf32>
    %cst_21 = arith.constant 1.000000e+00 : f32
    %86 = vector.broadcast %cst_21 : f32 to vector<8x32xf32>
    %87 = arith.addf %86, %85 : vector<8x32xf32>
    %88 = arith.divf %86, %87 : vector<8x32xf32>
    %89 = arith.mulf %80, %63 : vector<8x32xf32>
    %90 = arith.mulf %74, %82 : vector<8x32xf32>
    %91 = arith.addf %89, %90 : vector<8x32xf32>
    %92 = math.tanh %91 : vector<8x32xf32>
    %93 = arith.mulf %88, %92 : vector<8x32xf32>
    %94 = vector.extract_strided_slice %7 {offsets = [24, 0], sizes = [8, 128], strides = [1, 1]} : vector<64x128xf32> to vector<8x128xf32>
    %cst_22 = arith.constant dense<0.000000e+00> : vector<8x128xf32>
    %95 = tpu.matmul %93, %3, %cst_22 {dimension_numbers = #tpu.dot_dimension_numbers<[1], [0], [0], [1], [0, 0, 1, 1], [], []>} : vector<8x32xf32>, vector<32x128xf32>, vector<8x128xf32> -> vector<8x128xf32>
    %96 = arith.addf %94, %95 : vector<8x128xf32>
    %97 = vector.extract_strided_slice %96 {offsets = [0, 0], sizes = [8, 32], strides = [1, 1]} : vector<8x128xf32> to vector<8x32xf32>
    %98 = arith.negf %97 : vector<8x32xf32>
    %99 = math.exp %98 : vector<8x32xf32>
    %cst_23 = arith.constant 1.000000e+00 : f32
    %100 = vector.broadcast %cst_23 : f32 to vector<8x32xf32>
    %101 = arith.addf %100, %99 : vector<8x32xf32>
    %102 = arith.divf %100, %101 : vector<8x32xf32>
    %103 = vector.extract_strided_slice %96 {offsets = [0, 32], sizes = [8, 32], strides = [1, 1]} : vector<8x128xf32> to vector<8x32xf32>
    %104 = arith.negf %103 : vector<8x32xf32>
    %105 = math.exp %104 : vector<8x32xf32>
    %cst_24 = arith.constant 1.000000e+00 : f32
    %106 = vector.broadcast %cst_24 : f32 to vector<8x32xf32>
    %107 = arith.addf %106, %105 : vector<8x32xf32>
    %108 = arith.divf %106, %107 : vector<8x32xf32>
    %109 = vector.extract_strided_slice %96 {offsets = [0, 64], sizes = [8, 32], strides = [1, 1]} : vector<8x128xf32> to vector<8x32xf32>
    %110 = math.tanh %109 : vector<8x32xf32>
    %111 = vector.extract_strided_slice %96 {offsets = [0, 96], sizes = [8, 32], strides = [1, 1]} : vector<8x128xf32> to vector<8x32xf32>
    %112 = arith.negf %111 : vector<8x32xf32>
    %113 = math.exp %112 : vector<8x32xf32>
    %cst_25 = arith.constant 1.000000e+00 : f32
    %114 = vector.broadcast %cst_25 : f32 to vector<8x32xf32>
    %115 = arith.addf %114, %113 : vector<8x32xf32>
    %116 = arith.divf %114, %115 : vector<8x32xf32>
    %117 = arith.mulf %108, %91 : vector<8x32xf32>
    %118 = arith.mulf %102, %110 : vector<8x32xf32>
    %119 = arith.addf %117, %118 : vector<8x32xf32>
    %120 = math.tanh %119 : vector<8x32xf32>
    %121 = arith.mulf %116, %120 : vector<8x32xf32>
    %122 = vector.extract_strided_slice %7 {offsets = [32, 0], sizes = [8, 128], strides = [1, 1]} : vector<64x128xf32> to vector<8x128xf32>
    %cst_26 = arith.constant dense<0.000000e+00> : vector<8x128xf32>
    %123 = tpu.matmul %121, %3, %cst_26 {dimension_numbers = #tpu.dot_dimension_numbers<[1], [0], [0], [1], [0, 0, 1, 1], [], []>} : vector<8x32xf32>, vector<32x128xf32>, vector<8x128xf32> -> vector<8x128xf32>
    %124 = arith.addf %122, %123 : vector<8x128xf32>
    %125 = vector.extract_strided_slice %124 {offsets = [0, 0], sizes = [8, 32], strides = [1, 1]} : vector<8x128xf32> to vector<8x32xf32>
    %126 = arith.negf %125 : vector<8x32xf32>
    %127 = math.exp %126 : vector<8x32xf32>
    %cst_27 = arith.constant 1.000000e+00 : f32
    %128 = vector.broadcast %cst_27 : f32 to vector<8x32xf32>
    %129 = arith.addf %128, %127 : vector<8x32xf32>
    %130 = arith.divf %128, %129 : vector<8x32xf32>
    %131 = vector.extract_strided_slice %124 {offsets = [0, 32], sizes = [8, 32], strides = [1, 1]} : vector<8x128xf32> to vector<8x32xf32>
    %132 = arith.negf %131 : vector<8x32xf32>
    %133 = math.exp %132 : vector<8x32xf32>
    %cst_28 = arith.constant 1.000000e+00 : f32
    %134 = vector.broadcast %cst_28 : f32 to vector<8x32xf32>
    %135 = arith.addf %134, %133 : vector<8x32xf32>
    %136 = arith.divf %134, %135 : vector<8x32xf32>
    %137 = vector.extract_strided_slice %124 {offsets = [0, 64], sizes = [8, 32], strides = [1, 1]} : vector<8x128xf32> to vector<8x32xf32>
    %138 = math.tanh %137 : vector<8x32xf32>
    %139 = vector.extract_strided_slice %124 {offsets = [0, 96], sizes = [8, 32], strides = [1, 1]} : vector<8x128xf32> to vector<8x32xf32>
    %140 = arith.negf %139 : vector<8x32xf32>
    %141 = math.exp %140 : vector<8x32xf32>
    %cst_29 = arith.constant 1.000000e+00 : f32
    %142 = vector.broadcast %cst_29 : f32 to vector<8x32xf32>
    %143 = arith.addf %142, %141 : vector<8x32xf32>
    %144 = arith.divf %142, %143 : vector<8x32xf32>
    %145 = arith.mulf %136, %119 : vector<8x32xf32>
    %146 = arith.mulf %130, %138 : vector<8x32xf32>
    %147 = arith.addf %145, %146 : vector<8x32xf32>
    %148 = math.tanh %147 : vector<8x32xf32>
    %149 = arith.mulf %144, %148 : vector<8x32xf32>
    %150 = vector.extract_strided_slice %7 {offsets = [40, 0], sizes = [8, 128], strides = [1, 1]} : vector<64x128xf32> to vector<8x128xf32>
    %cst_30 = arith.constant dense<0.000000e+00> : vector<8x128xf32>
    %151 = tpu.matmul %149, %3, %cst_30 {dimension_numbers = #tpu.dot_dimension_numbers<[1], [0], [0], [1], [0, 0, 1, 1], [], []>} : vector<8x32xf32>, vector<32x128xf32>, vector<8x128xf32> -> vector<8x128xf32>
    %152 = arith.addf %150, %151 : vector<8x128xf32>
    %153 = vector.extract_strided_slice %152 {offsets = [0, 0], sizes = [8, 32], strides = [1, 1]} : vector<8x128xf32> to vector<8x32xf32>
    %154 = arith.negf %153 : vector<8x32xf32>
    %155 = math.exp %154 : vector<8x32xf32>
    %cst_31 = arith.constant 1.000000e+00 : f32
    %156 = vector.broadcast %cst_31 : f32 to vector<8x32xf32>
    %157 = arith.addf %156, %155 : vector<8x32xf32>
    %158 = arith.divf %156, %157 : vector<8x32xf32>
    %159 = vector.extract_strided_slice %152 {offsets = [0, 32], sizes = [8, 32], strides = [1, 1]} : vector<8x128xf32> to vector<8x32xf32>
    %160 = arith.negf %159 : vector<8x32xf32>
    %161 = math.exp %160 : vector<8x32xf32>
    %cst_32 = arith.constant 1.000000e+00 : f32
    %162 = vector.broadcast %cst_32 : f32 to vector<8x32xf32>
    %163 = arith.addf %162, %161 : vector<8x32xf32>
    %164 = arith.divf %162, %163 : vector<8x32xf32>
    %165 = vector.extract_strided_slice %152 {offsets = [0, 64], sizes = [8, 32], strides = [1, 1]} : vector<8x128xf32> to vector<8x32xf32>
    %166 = math.tanh %165 : vector<8x32xf32>
    %167 = vector.extract_strided_slice %152 {offsets = [0, 96], sizes = [8, 32], strides = [1, 1]} : vector<8x128xf32> to vector<8x32xf32>
    %168 = arith.negf %167 : vector<8x32xf32>
    %169 = math.exp %168 : vector<8x32xf32>
    %cst_33 = arith.constant 1.000000e+00 : f32
    %170 = vector.broadcast %cst_33 : f32 to vector<8x32xf32>
    %171 = arith.addf %170, %169 : vector<8x32xf32>
    %172 = arith.divf %170, %171 : vector<8x32xf32>
    %173 = arith.mulf %164, %147 : vector<8x32xf32>
    %174 = arith.mulf %158, %166 : vector<8x32xf32>
    %175 = arith.addf %173, %174 : vector<8x32xf32>
    %176 = math.tanh %175 : vector<8x32xf32>
    %177 = arith.mulf %172, %176 : vector<8x32xf32>
    %178 = vector.extract_strided_slice %7 {offsets = [48, 0], sizes = [8, 128], strides = [1, 1]} : vector<64x128xf32> to vector<8x128xf32>
    %cst_34 = arith.constant dense<0.000000e+00> : vector<8x128xf32>
    %179 = tpu.matmul %177, %3, %cst_34 {dimension_numbers = #tpu.dot_dimension_numbers<[1], [0], [0], [1], [0, 0, 1, 1], [], []>} : vector<8x32xf32>, vector<32x128xf32>, vector<8x128xf32> -> vector<8x128xf32>
    %180 = arith.addf %178, %179 : vector<8x128xf32>
    %181 = vector.extract_strided_slice %180 {offsets = [0, 0], sizes = [8, 32], strides = [1, 1]} : vector<8x128xf32> to vector<8x32xf32>
    %182 = arith.negf %181 : vector<8x32xf32>
    %183 = math.exp %182 : vector<8x32xf32>
    %cst_35 = arith.constant 1.000000e+00 : f32
    %184 = vector.broadcast %cst_35 : f32 to vector<8x32xf32>
    %185 = arith.addf %184, %183 : vector<8x32xf32>
    %186 = arith.divf %184, %185 : vector<8x32xf32>
    %187 = vector.extract_strided_slice %180 {offsets = [0, 32], sizes = [8, 32], strides = [1, 1]} : vector<8x128xf32> to vector<8x32xf32>
    %188 = arith.negf %187 : vector<8x32xf32>
    %189 = math.exp %188 : vector<8x32xf32>
    %cst_36 = arith.constant 1.000000e+00 : f32
    %190 = vector.broadcast %cst_36 : f32 to vector<8x32xf32>
    %191 = arith.addf %190, %189 : vector<8x32xf32>
    %192 = arith.divf %190, %191 : vector<8x32xf32>
    %193 = vector.extract_strided_slice %180 {offsets = [0, 64], sizes = [8, 32], strides = [1, 1]} : vector<8x128xf32> to vector<8x32xf32>
    %194 = math.tanh %193 : vector<8x32xf32>
    %195 = vector.extract_strided_slice %180 {offsets = [0, 96], sizes = [8, 32], strides = [1, 1]} : vector<8x128xf32> to vector<8x32xf32>
    %196 = arith.negf %195 : vector<8x32xf32>
    %197 = math.exp %196 : vector<8x32xf32>
    %cst_37 = arith.constant 1.000000e+00 : f32
    %198 = vector.broadcast %cst_37 : f32 to vector<8x32xf32>
    %199 = arith.addf %198, %197 : vector<8x32xf32>
    %200 = arith.divf %198, %199 : vector<8x32xf32>
    %201 = arith.mulf %192, %175 : vector<8x32xf32>
    %202 = arith.mulf %186, %194 : vector<8x32xf32>
    %203 = arith.addf %201, %202 : vector<8x32xf32>
    %204 = math.tanh %203 : vector<8x32xf32>
    %205 = arith.mulf %200, %204 : vector<8x32xf32>
    %206 = vector.extract_strided_slice %7 {offsets = [56, 0], sizes = [8, 128], strides = [1, 1]} : vector<64x128xf32> to vector<8x128xf32>
    %cst_38 = arith.constant dense<0.000000e+00> : vector<8x128xf32>
    %207 = tpu.matmul %205, %3, %cst_38 {dimension_numbers = #tpu.dot_dimension_numbers<[1], [0], [0], [1], [0, 0, 1, 1], [], []>} : vector<8x32xf32>, vector<32x128xf32>, vector<8x128xf32> -> vector<8x128xf32>
    %208 = arith.addf %206, %207 : vector<8x128xf32>
    %209 = vector.extract_strided_slice %208 {offsets = [0, 0], sizes = [8, 32], strides = [1, 1]} : vector<8x128xf32> to vector<8x32xf32>
    %210 = arith.negf %209 : vector<8x32xf32>
    %211 = math.exp %210 : vector<8x32xf32>
    %cst_39 = arith.constant 1.000000e+00 : f32
    %212 = vector.broadcast %cst_39 : f32 to vector<8x32xf32>
    %213 = arith.addf %212, %211 : vector<8x32xf32>
    %214 = arith.divf %212, %213 : vector<8x32xf32>
    %215 = vector.extract_strided_slice %208 {offsets = [0, 32], sizes = [8, 32], strides = [1, 1]} : vector<8x128xf32> to vector<8x32xf32>
    %216 = arith.negf %215 : vector<8x32xf32>
    %217 = math.exp %216 : vector<8x32xf32>
    %cst_40 = arith.constant 1.000000e+00 : f32
    %218 = vector.broadcast %cst_40 : f32 to vector<8x32xf32>
    %219 = arith.addf %218, %217 : vector<8x32xf32>
    %220 = arith.divf %218, %219 : vector<8x32xf32>
    %221 = vector.extract_strided_slice %208 {offsets = [0, 64], sizes = [8, 32], strides = [1, 1]} : vector<8x128xf32> to vector<8x32xf32>
    %222 = math.tanh %221 : vector<8x32xf32>
    %223 = vector.extract_strided_slice %208 {offsets = [0, 96], sizes = [8, 32], strides = [1, 1]} : vector<8x128xf32> to vector<8x32xf32>
    %224 = arith.negf %223 : vector<8x32xf32>
    %225 = math.exp %224 : vector<8x32xf32>
    %cst_41 = arith.constant 1.000000e+00 : f32
    %226 = vector.broadcast %cst_41 : f32 to vector<8x32xf32>
    %227 = arith.addf %226, %225 : vector<8x32xf32>
    %228 = arith.divf %226, %227 : vector<8x32xf32>
    %229 = arith.mulf %220, %203 : vector<8x32xf32>
    %230 = arith.mulf %214, %222 : vector<8x32xf32>
    %231 = arith.addf %229, %230 : vector<8x32xf32>
    %232 = math.tanh %231 : vector<8x32xf32>
    %233 = arith.mulf %228, %232 : vector<8x32xf32>
    %234 = tpu.concatenate %37, %65, %93, %121, %149, %177, %205, %233 in 0 : vector<8x32xf32>, vector<8x32xf32>, vector<8x32xf32>, vector<8x32xf32>, vector<8x32xf32>, vector<8x32xf32>, vector<8x32xf32>, vector<8x32xf32> -> vector<64x32xf32>
    %c0_42 = arith.constant 0 : index
    %c0_43 = arith.constant 0 : index
    %235 = vector.load %arg4[%c0_42, %c0_43] : memref<32x128xf32, #tpu.memory_space<vmem>>, vector<32x128xf32>
    %c0_44 = arith.constant 0 : index
    %c0_45 = arith.constant 0 : index
    %236 = vector.load %arg5[%c0_44, %c0_45] : memref<32x128xf32, #tpu.memory_space<vmem>>, vector<32x128xf32>
    %c0_46 = arith.constant 0 : index
    %c0_47 = arith.constant 0 : index
    %237 = vector.load %arg6[%c0_46, %c0_47] : memref<1x128xf32, #tpu.memory_space<vmem>>, vector<1x128xf32>
    %cst_48 = arith.constant dense<0.000000e+00> : vector<64x128xf32>
    %238 = tpu.matmul %234, %235, %cst_48 {dimension_numbers = #tpu.dot_dimension_numbers<[1], [0], [0], [1], [0, 0, 1, 1], [], []>} : vector<64x32xf32>, vector<32x128xf32>, vector<64x128xf32> -> vector<64x128xf32>
    %239 = vector.broadcast %237 : vector<1x128xf32> to vector<64x128xf32>
    %240 = arith.addf %238, %239 : vector<64x128xf32>
    %cst_49 = arith.constant 0.000000e+00 : f32
    %241 = vector.broadcast %cst_49 : f32 to vector<8x32xf32>
    %cst_50 = arith.constant 0.000000e+00 : f32
    %242 = vector.broadcast %cst_50 : f32 to vector<8x32xf32>
    %243 = vector.extract_strided_slice %240 {offsets = [0, 0], sizes = [8, 128], strides = [1, 1]} : vector<64x128xf32> to vector<8x128xf32>
    %cst_51 = arith.constant dense<0.000000e+00> : vector<8x128xf32>
    %244 = tpu.matmul %241, %236, %cst_51 {dimension_numbers = #tpu.dot_dimension_numbers<[1], [0], [0], [1], [0, 0, 1, 1], [], []>} : vector<8x32xf32>, vector<32x128xf32>, vector<8x128xf32> -> vector<8x128xf32>
    %245 = arith.addf %243, %244 : vector<8x128xf32>
    %246 = vector.extract_strided_slice %245 {offsets = [0, 0], sizes = [8, 32], strides = [1, 1]} : vector<8x128xf32> to vector<8x32xf32>
    %247 = arith.negf %246 : vector<8x32xf32>
    %248 = math.exp %247 : vector<8x32xf32>
    %cst_52 = arith.constant 1.000000e+00 : f32
    %249 = vector.broadcast %cst_52 : f32 to vector<8x32xf32>
    %250 = arith.addf %249, %248 : vector<8x32xf32>
    %251 = arith.divf %249, %250 : vector<8x32xf32>
    %252 = vector.extract_strided_slice %245 {offsets = [0, 32], sizes = [8, 32], strides = [1, 1]} : vector<8x128xf32> to vector<8x32xf32>
    %253 = arith.negf %252 : vector<8x32xf32>
    %254 = math.exp %253 : vector<8x32xf32>
    %cst_53 = arith.constant 1.000000e+00 : f32
    %255 = vector.broadcast %cst_53 : f32 to vector<8x32xf32>
    %256 = arith.addf %255, %254 : vector<8x32xf32>
    %257 = arith.divf %255, %256 : vector<8x32xf32>
    %258 = vector.extract_strided_slice %245 {offsets = [0, 64], sizes = [8, 32], strides = [1, 1]} : vector<8x128xf32> to vector<8x32xf32>
    %259 = math.tanh %258 : vector<8x32xf32>
    %260 = vector.extract_strided_slice %245 {offsets = [0, 96], sizes = [8, 32], strides = [1, 1]} : vector<8x128xf32> to vector<8x32xf32>
    %261 = arith.negf %260 : vector<8x32xf32>
    %262 = math.exp %261 : vector<8x32xf32>
    %cst_54 = arith.constant 1.000000e+00 : f32
    %263 = vector.broadcast %cst_54 : f32 to vector<8x32xf32>
    %264 = arith.addf %263, %262 : vector<8x32xf32>
    %265 = arith.divf %263, %264 : vector<8x32xf32>
    %266 = arith.mulf %257, %242 : vector<8x32xf32>
    %267 = arith.mulf %251, %259 : vector<8x32xf32>
    %268 = arith.addf %266, %267 : vector<8x32xf32>
    %269 = math.tanh %268 : vector<8x32xf32>
    %270 = arith.mulf %265, %269 : vector<8x32xf32>
    %271 = vector.extract_strided_slice %240 {offsets = [8, 0], sizes = [8, 128], strides = [1, 1]} : vector<64x128xf32> to vector<8x128xf32>
    %cst_55 = arith.constant dense<0.000000e+00> : vector<8x128xf32>
    %272 = tpu.matmul %270, %236, %cst_55 {dimension_numbers = #tpu.dot_dimension_numbers<[1], [0], [0], [1], [0, 0, 1, 1], [], []>} : vector<8x32xf32>, vector<32x128xf32>, vector<8x128xf32> -> vector<8x128xf32>
    %273 = arith.addf %271, %272 : vector<8x128xf32>
    %274 = vector.extract_strided_slice %273 {offsets = [0, 0], sizes = [8, 32], strides = [1, 1]} : vector<8x128xf32> to vector<8x32xf32>
    %275 = arith.negf %274 : vector<8x32xf32>
    %276 = math.exp %275 : vector<8x32xf32>
    %cst_56 = arith.constant 1.000000e+00 : f32
    %277 = vector.broadcast %cst_56 : f32 to vector<8x32xf32>
    %278 = arith.addf %277, %276 : vector<8x32xf32>
    %279 = arith.divf %277, %278 : vector<8x32xf32>
    %280 = vector.extract_strided_slice %273 {offsets = [0, 32], sizes = [8, 32], strides = [1, 1]} : vector<8x128xf32> to vector<8x32xf32>
    %281 = arith.negf %280 : vector<8x32xf32>
    %282 = math.exp %281 : vector<8x32xf32>
    %cst_57 = arith.constant 1.000000e+00 : f32
    %283 = vector.broadcast %cst_57 : f32 to vector<8x32xf32>
    %284 = arith.addf %283, %282 : vector<8x32xf32>
    %285 = arith.divf %283, %284 : vector<8x32xf32>
    %286 = vector.extract_strided_slice %273 {offsets = [0, 64], sizes = [8, 32], strides = [1, 1]} : vector<8x128xf32> to vector<8x32xf32>
    %287 = math.tanh %286 : vector<8x32xf32>
    %288 = vector.extract_strided_slice %273 {offsets = [0, 96], sizes = [8, 32], strides = [1, 1]} : vector<8x128xf32> to vector<8x32xf32>
    %289 = arith.negf %288 : vector<8x32xf32>
    %290 = math.exp %289 : vector<8x32xf32>
    %cst_58 = arith.constant 1.000000e+00 : f32
    %291 = vector.broadcast %cst_58 : f32 to vector<8x32xf32>
    %292 = arith.addf %291, %290 : vector<8x32xf32>
    %293 = arith.divf %291, %292 : vector<8x32xf32>
    %294 = arith.mulf %285, %268 : vector<8x32xf32>
    %295 = arith.mulf %279, %287 : vector<8x32xf32>
    %296 = arith.addf %294, %295 : vector<8x32xf32>
    %297 = math.tanh %296 : vector<8x32xf32>
    %298 = arith.mulf %293, %297 : vector<8x32xf32>
    %299 = vector.extract_strided_slice %240 {offsets = [16, 0], sizes = [8, 128], strides = [1, 1]} : vector<64x128xf32> to vector<8x128xf32>
    %cst_59 = arith.constant dense<0.000000e+00> : vector<8x128xf32>
    %300 = tpu.matmul %298, %236, %cst_59 {dimension_numbers = #tpu.dot_dimension_numbers<[1], [0], [0], [1], [0, 0, 1, 1], [], []>} : vector<8x32xf32>, vector<32x128xf32>, vector<8x128xf32> -> vector<8x128xf32>
    %301 = arith.addf %299, %300 : vector<8x128xf32>
    %302 = vector.extract_strided_slice %301 {offsets = [0, 0], sizes = [8, 32], strides = [1, 1]} : vector<8x128xf32> to vector<8x32xf32>
    %303 = arith.negf %302 : vector<8x32xf32>
    %304 = math.exp %303 : vector<8x32xf32>
    %cst_60 = arith.constant 1.000000e+00 : f32
    %305 = vector.broadcast %cst_60 : f32 to vector<8x32xf32>
    %306 = arith.addf %305, %304 : vector<8x32xf32>
    %307 = arith.divf %305, %306 : vector<8x32xf32>
    %308 = vector.extract_strided_slice %301 {offsets = [0, 32], sizes = [8, 32], strides = [1, 1]} : vector<8x128xf32> to vector<8x32xf32>
    %309 = arith.negf %308 : vector<8x32xf32>
    %310 = math.exp %309 : vector<8x32xf32>
    %cst_61 = arith.constant 1.000000e+00 : f32
    %311 = vector.broadcast %cst_61 : f32 to vector<8x32xf32>
    %312 = arith.addf %311, %310 : vector<8x32xf32>
    %313 = arith.divf %311, %312 : vector<8x32xf32>
    %314 = vector.extract_strided_slice %301 {offsets = [0, 64], sizes = [8, 32], strides = [1, 1]} : vector<8x128xf32> to vector<8x32xf32>
    %315 = math.tanh %314 : vector<8x32xf32>
    %316 = vector.extract_strided_slice %301 {offsets = [0, 96], sizes = [8, 32], strides = [1, 1]} : vector<8x128xf32> to vector<8x32xf32>
    %317 = arith.negf %316 : vector<8x32xf32>
    %318 = math.exp %317 : vector<8x32xf32>
    %cst_62 = arith.constant 1.000000e+00 : f32
    %319 = vector.broadcast %cst_62 : f32 to vector<8x32xf32>
    %320 = arith.addf %319, %318 : vector<8x32xf32>
    %321 = arith.divf %319, %320 : vector<8x32xf32>
    %322 = arith.mulf %313, %296 : vector<8x32xf32>
    %323 = arith.mulf %307, %315 : vector<8x32xf32>
    %324 = arith.addf %322, %323 : vector<8x32xf32>
    %325 = math.tanh %324 : vector<8x32xf32>
    %326 = arith.mulf %321, %325 : vector<8x32xf32>
    %327 = vector.extract_strided_slice %240 {offsets = [24, 0], sizes = [8, 128], strides = [1, 1]} : vector<64x128xf32> to vector<8x128xf32>
    %cst_63 = arith.constant dense<0.000000e+00> : vector<8x128xf32>
    %328 = tpu.matmul %326, %236, %cst_63 {dimension_numbers = #tpu.dot_dimension_numbers<[1], [0], [0], [1], [0, 0, 1, 1], [], []>} : vector<8x32xf32>, vector<32x128xf32>, vector<8x128xf32> -> vector<8x128xf32>
    %329 = arith.addf %327, %328 : vector<8x128xf32>
    %330 = vector.extract_strided_slice %329 {offsets = [0, 0], sizes = [8, 32], strides = [1, 1]} : vector<8x128xf32> to vector<8x32xf32>
    %331 = arith.negf %330 : vector<8x32xf32>
    %332 = math.exp %331 : vector<8x32xf32>
    %cst_64 = arith.constant 1.000000e+00 : f32
    %333 = vector.broadcast %cst_64 : f32 to vector<8x32xf32>
    %334 = arith.addf %333, %332 : vector<8x32xf32>
    %335 = arith.divf %333, %334 : vector<8x32xf32>
    %336 = vector.extract_strided_slice %329 {offsets = [0, 32], sizes = [8, 32], strides = [1, 1]} : vector<8x128xf32> to vector<8x32xf32>
    %337 = arith.negf %336 : vector<8x32xf32>
    %338 = math.exp %337 : vector<8x32xf32>
    %cst_65 = arith.constant 1.000000e+00 : f32
    %339 = vector.broadcast %cst_65 : f32 to vector<8x32xf32>
    %340 = arith.addf %339, %338 : vector<8x32xf32>
    %341 = arith.divf %339, %340 : vector<8x32xf32>
    %342 = vector.extract_strided_slice %329 {offsets = [0, 64], sizes = [8, 32], strides = [1, 1]} : vector<8x128xf32> to vector<8x32xf32>
    %343 = math.tanh %342 : vector<8x32xf32>
    %344 = vector.extract_strided_slice %329 {offsets = [0, 96], sizes = [8, 32], strides = [1, 1]} : vector<8x128xf32> to vector<8x32xf32>
    %345 = arith.negf %344 : vector<8x32xf32>
    %346 = math.exp %345 : vector<8x32xf32>
    %cst_66 = arith.constant 1.000000e+00 : f32
    %347 = vector.broadcast %cst_66 : f32 to vector<8x32xf32>
    %348 = arith.addf %347, %346 : vector<8x32xf32>
    %349 = arith.divf %347, %348 : vector<8x32xf32>
    %350 = arith.mulf %341, %324 : vector<8x32xf32>
    %351 = arith.mulf %335, %343 : vector<8x32xf32>
    %352 = arith.addf %350, %351 : vector<8x32xf32>
    %353 = math.tanh %352 : vector<8x32xf32>
    %354 = arith.mulf %349, %353 : vector<8x32xf32>
    %355 = vector.extract_strided_slice %240 {offsets = [32, 0], sizes = [8, 128], strides = [1, 1]} : vector<64x128xf32> to vector<8x128xf32>
    %cst_67 = arith.constant dense<0.000000e+00> : vector<8x128xf32>
    %356 = tpu.matmul %354, %236, %cst_67 {dimension_numbers = #tpu.dot_dimension_numbers<[1], [0], [0], [1], [0, 0, 1, 1], [], []>} : vector<8x32xf32>, vector<32x128xf32>, vector<8x128xf32> -> vector<8x128xf32>
    %357 = arith.addf %355, %356 : vector<8x128xf32>
    %358 = vector.extract_strided_slice %357 {offsets = [0, 0], sizes = [8, 32], strides = [1, 1]} : vector<8x128xf32> to vector<8x32xf32>
    %359 = arith.negf %358 : vector<8x32xf32>
    %360 = math.exp %359 : vector<8x32xf32>
    %cst_68 = arith.constant 1.000000e+00 : f32
    %361 = vector.broadcast %cst_68 : f32 to vector<8x32xf32>
    %362 = arith.addf %361, %360 : vector<8x32xf32>
    %363 = arith.divf %361, %362 : vector<8x32xf32>
    %364 = vector.extract_strided_slice %357 {offsets = [0, 32], sizes = [8, 32], strides = [1, 1]} : vector<8x128xf32> to vector<8x32xf32>
    %365 = arith.negf %364 : vector<8x32xf32>
    %366 = math.exp %365 : vector<8x32xf32>
    %cst_69 = arith.constant 1.000000e+00 : f32
    %367 = vector.broadcast %cst_69 : f32 to vector<8x32xf32>
    %368 = arith.addf %367, %366 : vector<8x32xf32>
    %369 = arith.divf %367, %368 : vector<8x32xf32>
    %370 = vector.extract_strided_slice %357 {offsets = [0, 64], sizes = [8, 32], strides = [1, 1]} : vector<8x128xf32> to vector<8x32xf32>
    %371 = math.tanh %370 : vector<8x32xf32>
    %372 = vector.extract_strided_slice %357 {offsets = [0, 96], sizes = [8, 32], strides = [1, 1]} : vector<8x128xf32> to vector<8x32xf32>
    %373 = arith.negf %372 : vector<8x32xf32>
    %374 = math.exp %373 : vector<8x32xf32>
    %cst_70 = arith.constant 1.000000e+00 : f32
    %375 = vector.broadcast %cst_70 : f32 to vector<8x32xf32>
    %376 = arith.addf %375, %374 : vector<8x32xf32>
    %377 = arith.divf %375, %376 : vector<8x32xf32>
    %378 = arith.mulf %369, %352 : vector<8x32xf32>
    %379 = arith.mulf %363, %371 : vector<8x32xf32>
    %380 = arith.addf %378, %379 : vector<8x32xf32>
    %381 = math.tanh %380 : vector<8x32xf32>
    %382 = arith.mulf %377, %381 : vector<8x32xf32>
    %383 = vector.extract_strided_slice %240 {offsets = [40, 0], sizes = [8, 128], strides = [1, 1]} : vector<64x128xf32> to vector<8x128xf32>
    %cst_71 = arith.constant dense<0.000000e+00> : vector<8x128xf32>
    %384 = tpu.matmul %382, %236, %cst_71 {dimension_numbers = #tpu.dot_dimension_numbers<[1], [0], [0], [1], [0, 0, 1, 1], [], []>} : vector<8x32xf32>, vector<32x128xf32>, vector<8x128xf32> -> vector<8x128xf32>
    %385 = arith.addf %383, %384 : vector<8x128xf32>
    %386 = vector.extract_strided_slice %385 {offsets = [0, 0], sizes = [8, 32], strides = [1, 1]} : vector<8x128xf32> to vector<8x32xf32>
    %387 = arith.negf %386 : vector<8x32xf32>
    %388 = math.exp %387 : vector<8x32xf32>
    %cst_72 = arith.constant 1.000000e+00 : f32
    %389 = vector.broadcast %cst_72 : f32 to vector<8x32xf32>
    %390 = arith.addf %389, %388 : vector<8x32xf32>
    %391 = arith.divf %389, %390 : vector<8x32xf32>
    %392 = vector.extract_strided_slice %385 {offsets = [0, 32], sizes = [8, 32], strides = [1, 1]} : vector<8x128xf32> to vector<8x32xf32>
    %393 = arith.negf %392 : vector<8x32xf32>
    %394 = math.exp %393 : vector<8x32xf32>
    %cst_73 = arith.constant 1.000000e+00 : f32
    %395 = vector.broadcast %cst_73 : f32 to vector<8x32xf32>
    %396 = arith.addf %395, %394 : vector<8x32xf32>
    %397 = arith.divf %395, %396 : vector<8x32xf32>
    %398 = vector.extract_strided_slice %385 {offsets = [0, 64], sizes = [8, 32], strides = [1, 1]} : vector<8x128xf32> to vector<8x32xf32>
    %399 = math.tanh %398 : vector<8x32xf32>
    %400 = vector.extract_strided_slice %385 {offsets = [0, 96], sizes = [8, 32], strides = [1, 1]} : vector<8x128xf32> to vector<8x32xf32>
    %401 = arith.negf %400 : vector<8x32xf32>
    %402 = math.exp %401 : vector<8x32xf32>
    %cst_74 = arith.constant 1.000000e+00 : f32
    %403 = vector.broadcast %cst_74 : f32 to vector<8x32xf32>
    %404 = arith.addf %403, %402 : vector<8x32xf32>
    %405 = arith.divf %403, %404 : vector<8x32xf32>
    %406 = arith.mulf %397, %380 : vector<8x32xf32>
    %407 = arith.mulf %391, %399 : vector<8x32xf32>
    %408 = arith.addf %406, %407 : vector<8x32xf32>
    %409 = math.tanh %408 : vector<8x32xf32>
    %410 = arith.mulf %405, %409 : vector<8x32xf32>
    %411 = vector.extract_strided_slice %240 {offsets = [48, 0], sizes = [8, 128], strides = [1, 1]} : vector<64x128xf32> to vector<8x128xf32>
    %cst_75 = arith.constant dense<0.000000e+00> : vector<8x128xf32>
    %412 = tpu.matmul %410, %236, %cst_75 {dimension_numbers = #tpu.dot_dimension_numbers<[1], [0], [0], [1], [0, 0, 1, 1], [], []>} : vector<8x32xf32>, vector<32x128xf32>, vector<8x128xf32> -> vector<8x128xf32>
    %413 = arith.addf %411, %412 : vector<8x128xf32>
    %414 = vector.extract_strided_slice %413 {offsets = [0, 0], sizes = [8, 32], strides = [1, 1]} : vector<8x128xf32> to vector<8x32xf32>
    %415 = arith.negf %414 : vector<8x32xf32>
    %416 = math.exp %415 : vector<8x32xf32>
    %cst_76 = arith.constant 1.000000e+00 : f32
    %417 = vector.broadcast %cst_76 : f32 to vector<8x32xf32>
    %418 = arith.addf %417, %416 : vector<8x32xf32>
    %419 = arith.divf %417, %418 : vector<8x32xf32>
    %420 = vector.extract_strided_slice %413 {offsets = [0, 32], sizes = [8, 32], strides = [1, 1]} : vector<8x128xf32> to vector<8x32xf32>
    %421 = arith.negf %420 : vector<8x32xf32>
    %422 = math.exp %421 : vector<8x32xf32>
    %cst_77 = arith.constant 1.000000e+00 : f32
    %423 = vector.broadcast %cst_77 : f32 to vector<8x32xf32>
    %424 = arith.addf %423, %422 : vector<8x32xf32>
    %425 = arith.divf %423, %424 : vector<8x32xf32>
    %426 = vector.extract_strided_slice %413 {offsets = [0, 64], sizes = [8, 32], strides = [1, 1]} : vector<8x128xf32> to vector<8x32xf32>
    %427 = math.tanh %426 : vector<8x32xf32>
    %428 = vector.extract_strided_slice %413 {offsets = [0, 96], sizes = [8, 32], strides = [1, 1]} : vector<8x128xf32> to vector<8x32xf32>
    %429 = arith.negf %428 : vector<8x32xf32>
    %430 = math.exp %429 : vector<8x32xf32>
    %cst_78 = arith.constant 1.000000e+00 : f32
    %431 = vector.broadcast %cst_78 : f32 to vector<8x32xf32>
    %432 = arith.addf %431, %430 : vector<8x32xf32>
    %433 = arith.divf %431, %432 : vector<8x32xf32>
    %434 = arith.mulf %425, %408 : vector<8x32xf32>
    %435 = arith.mulf %419, %427 : vector<8x32xf32>
    %436 = arith.addf %434, %435 : vector<8x32xf32>
    %437 = math.tanh %436 : vector<8x32xf32>
    %438 = arith.mulf %433, %437 : vector<8x32xf32>
    %439 = vector.extract_strided_slice %240 {offsets = [56, 0], sizes = [8, 128], strides = [1, 1]} : vector<64x128xf32> to vector<8x128xf32>
    %cst_79 = arith.constant dense<0.000000e+00> : vector<8x128xf32>
    %440 = tpu.matmul %438, %236, %cst_79 {dimension_numbers = #tpu.dot_dimension_numbers<[1], [0], [0], [1], [0, 0, 1, 1], [], []>} : vector<8x32xf32>, vector<32x128xf32>, vector<8x128xf32> -> vector<8x128xf32>
    %441 = arith.addf %439, %440 : vector<8x128xf32>
    %442 = vector.extract_strided_slice %441 {offsets = [0, 0], sizes = [8, 32], strides = [1, 1]} : vector<8x128xf32> to vector<8x32xf32>
    %443 = arith.negf %442 : vector<8x32xf32>
    %444 = math.exp %443 : vector<8x32xf32>
    %cst_80 = arith.constant 1.000000e+00 : f32
    %445 = vector.broadcast %cst_80 : f32 to vector<8x32xf32>
    %446 = arith.addf %445, %444 : vector<8x32xf32>
    %447 = arith.divf %445, %446 : vector<8x32xf32>
    %448 = vector.extract_strided_slice %441 {offsets = [0, 32], sizes = [8, 32], strides = [1, 1]} : vector<8x128xf32> to vector<8x32xf32>
    %449 = arith.negf %448 : vector<8x32xf32>
    %450 = math.exp %449 : vector<8x32xf32>
    %cst_81 = arith.constant 1.000000e+00 : f32
    %451 = vector.broadcast %cst_81 : f32 to vector<8x32xf32>
    %452 = arith.addf %451, %450 : vector<8x32xf32>
    %453 = arith.divf %451, %452 : vector<8x32xf32>
    %454 = vector.extract_strided_slice %441 {offsets = [0, 64], sizes = [8, 32], strides = [1, 1]} : vector<8x128xf32> to vector<8x32xf32>
    %455 = math.tanh %454 : vector<8x32xf32>
    %456 = vector.extract_strided_slice %441 {offsets = [0, 96], sizes = [8, 32], strides = [1, 1]} : vector<8x128xf32> to vector<8x32xf32>
    %457 = arith.negf %456 : vector<8x32xf32>
    %458 = math.exp %457 : vector<8x32xf32>
    %cst_82 = arith.constant 1.000000e+00 : f32
    %459 = vector.broadcast %cst_82 : f32 to vector<8x32xf32>
    %460 = arith.addf %459, %458 : vector<8x32xf32>
    %461 = arith.divf %459, %460 : vector<8x32xf32>
    %462 = arith.mulf %453, %436 : vector<8x32xf32>
    %463 = arith.mulf %447, %455 : vector<8x32xf32>
    %464 = arith.addf %462, %463 : vector<8x32xf32>
    %465 = math.tanh %464 : vector<8x32xf32>
    %466 = arith.mulf %461, %465 : vector<8x32xf32>
    %467 = vector.extract_strided_slice %270 {offsets = [7, 0], sizes = [1, 32], strides = [1, 1]} : vector<8x32xf32> to vector<1x32xf32>
    %468 = vector.extract_strided_slice %298 {offsets = [7, 0], sizes = [1, 32], strides = [1, 1]} : vector<8x32xf32> to vector<1x32xf32>
    %469 = vector.extract_strided_slice %326 {offsets = [7, 0], sizes = [1, 32], strides = [1, 1]} : vector<8x32xf32> to vector<1x32xf32>
    %470 = vector.extract_strided_slice %354 {offsets = [7, 0], sizes = [1, 32], strides = [1, 1]} : vector<8x32xf32> to vector<1x32xf32>
    %471 = vector.extract_strided_slice %382 {offsets = [7, 0], sizes = [1, 32], strides = [1, 1]} : vector<8x32xf32> to vector<1x32xf32>
    %472 = vector.extract_strided_slice %410 {offsets = [7, 0], sizes = [1, 32], strides = [1, 1]} : vector<8x32xf32> to vector<1x32xf32>
    %473 = vector.extract_strided_slice %438 {offsets = [7, 0], sizes = [1, 32], strides = [1, 1]} : vector<8x32xf32> to vector<1x32xf32>
    %474 = vector.extract_strided_slice %466 {offsets = [7, 0], sizes = [1, 32], strides = [1, 1]} : vector<8x32xf32> to vector<1x32xf32>
    %475 = tpu.concatenate %467, %468, %469, %470, %471, %472, %473, %474 in 0 : vector<1x32xf32>, vector<1x32xf32>, vector<1x32xf32>, vector<1x32xf32>, vector<1x32xf32>, vector<1x32xf32>, vector<1x32xf32>, vector<1x32xf32> -> vector<8x32xf32>
    %c0_83 = arith.constant 0 : index
    %c0_84 = arith.constant 0 : index
    %476 = vector.load %arg7[%c0_83, %c0_84] : memref<32x16xf32, #tpu.memory_space<vmem>>, vector<32x16xf32>
    %cst_85 = arith.constant dense<0.000000e+00> : vector<8x16xf32>
    %477 = tpu.matmul %475, %476, %cst_85 {dimension_numbers = #tpu.dot_dimension_numbers<[1], [0], [0], [1], [0, 0, 1, 1], [], []>} : vector<8x32xf32>, vector<32x16xf32>, vector<8x16xf32> -> vector<8x16xf32>
    %c0_86 = arith.constant 0 : index
    %c0_87 = arith.constant 0 : index
    %478 = vector.load %arg8[%c0_86, %c0_87] : memref<1x16xf32, #tpu.memory_space<vmem>>, vector<1x16xf32>
    %479 = vector.broadcast %478 : vector<1x16xf32> to vector<8x16xf32>
    %480 = arith.addf %477, %479 : vector<8x16xf32>
    %cst_88 = arith.constant 0.000000e+00 : f32
    %481 = vector.broadcast %cst_88 : f32 to vector<8x16xf32>
    %482 = arith.maximumf %480, %481 : vector<8x16xf32>
    %c0_89 = arith.constant 0 : index
    %c0_90 = arith.constant 0 : index
    %483 = vector.load %arg9[%c0_89, %c0_90] : memref<16x8xf32, #tpu.memory_space<vmem>>, vector<16x8xf32>
    %cst_91 = arith.constant dense<0.000000e+00> : vector<8x8xf32>
    %484 = tpu.matmul %482, %483, %cst_91 {dimension_numbers = #tpu.dot_dimension_numbers<[1], [0], [0], [1], [0, 0, 1, 1], [], []>} : vector<8x16xf32>, vector<16x8xf32>, vector<8x8xf32> -> vector<8x8xf32>
    %c0_92 = arith.constant 0 : index
    %c0_93 = arith.constant 0 : index
    %485 = vector.load %arg10[%c0_92, %c0_93] : memref<1x8xf32, #tpu.memory_space<vmem>>, vector<1x8xf32>
    %486 = vector.broadcast %485 : vector<1x8xf32> to vector<8x8xf32>
    %487 = arith.addf %484, %486 : vector<8x8xf32>
    %cst_94 = arith.constant 0.000000e+00 : f32
    %488 = vector.broadcast %cst_94 : f32 to vector<8x8xf32>
    %489 = arith.maximumf %487, %488 : vector<8x8xf32>
    %c0_95 = arith.constant 0 : index
    %c0_96 = arith.constant 0 : index
    %490 = vector.load %arg11[%c0_95, %c0_96] : memref<8x4xf32, #tpu.memory_space<vmem>>, vector<8x4xf32>
    %cst_97 = arith.constant dense<0.000000e+00> : vector<8x4xf32>
    %491 = tpu.matmul %489, %490, %cst_97 {dimension_numbers = #tpu.dot_dimension_numbers<[1], [0], [0], [1], [0, 0, 1, 1], [], []>} : vector<8x8xf32>, vector<8x4xf32>, vector<8x4xf32> -> vector<8x4xf32>
    %c0_98 = arith.constant 0 : index
    %c0_99 = arith.constant 0 : index
    %492 = vector.load %arg12[%c0_98, %c0_99] : memref<1x4xf32, #tpu.memory_space<vmem>>, vector<1x4xf32>
    %493 = vector.broadcast %492 : vector<1x4xf32> to vector<8x4xf32>
    %494 = arith.addf %491, %493 : vector<8x4xf32>
    %c0_100 = arith.constant 0 : index
    %c0_101 = arith.constant 0 : index
    %495 = vector.load %arg13[%c0_100, %c0_101] : memref<8x4xf32, #tpu.memory_space<vmem>>, vector<8x4xf32>
    tpu.vector_store %arg13[%c0_100, %c0_101], %494 {strides = array<i32>} : memref<8x4xf32, #tpu.memory_space<vmem>>, vector<8x4xf32>,
    return
  }
}

</mosaic_0001>

<llo_original>
// kernel: simple_lstm_forward.1
$region0: #{simple_lstm_forward.1}
  #allocation0 [shape = 'u32[]', space=smem, size = 0x4, offset = 0x4, fixed_abs, tag = 'smem constant byte address 0x4 - core index']
  #allocation1 [shape = 'u32[144,128]{1,0:T(1,128)}', space=vmem, size = 0x12000, scoped, tag = 'internal scratch']
  %s0 = inlined_call_operand.vmem [shape: f32[8,8,16], index: 0, kind: input, shape index: {}]
  %s1 = inlined_call_operand.vmem [shape: f32[16,128], index: 1, kind: input, shape index: {}]
  %s2 = inlined_call_operand.vmem [shape: f32[32,128], index: 2, kind: input, shape index: {}]
  %s3 = inlined_call_operand.vmem [shape: f32[1,128], index: 3, kind: input, shape index: {}]
  %s4 = inlined_call_operand.vmem [shape: f32[32,128], index: 4, kind: input, shape index: {}]
  %s5 = inlined_call_operand.vmem [shape: f32[32,128], index: 5, kind: input, shape index: {}]
  %s6 = inlined_call_operand.vmem [shape: f32[1,128], index: 6, kind: input, shape index: {}]
  %s7 = inlined_call_operand.vmem [shape: f32[32,16], index: 7, kind: input, shape index: {}]
  %s8 = inlined_call_operand.vmem [shape: f32[1,16], index: 8, kind: input, shape index: {}]
  %s9 = inlined_call_operand.vmem [shape: f32[16,8], index: 9, kind: input, shape index: {}]
  %s10 = inlined_call_operand.vmem [shape: f32[1,8], index: 10, kind: input, shape index: {}]
  %s11 = inlined_call_operand.vmem [shape: f32[8,4], index: 11, kind: input, shape index: {}]
  %s12 = inlined_call_operand.vmem [shape: f32[1,4], index: 12, kind: input, shape index: {}]
  %s13 = inlined_call_operand.vmem [shape: f32[8,4], index: 13, kind: output, shape index: {}]
  %s14 = sld [smem:[#allocation0]]
  $region62: #{simple_lstm_forward.1} parent=0
    _
  %s16 = ssub.s32 1, %s14
  %s17 = scalar_select 0, %s16, %s14
  // Predicated region
  $region2: #{simple_lstm_forward.1} parent=0 // pred_check
    _
  $region3: #{simple_lstm_forward.1} parent=0 // pred_check_branch
    %19 = sbr.rel (0) target = $region5
  $region4: #{simple_lstm_forward.1} parent=0 // pred_region
    _
  $region5: #{simple_lstm_forward.1} parent=0 // pred_fallthru
    _
  // Predicated region
  $region6: #{simple_lstm_forward.1} parent=0 // pred_check
    _
  $region7: #{simple_lstm_forward.1} parent=0 // pred_check_branch
    %21 = sbr.rel (0) target = $region9
  $region8: #{simple_lstm_forward.1} parent=0 // pred_region
    _
  $region9: #{simple_lstm_forward.1} parent=0 // pred_fallthru
    _
  // Predicated region
  $region10: #{simple_lstm_forward.1} parent=0 // pred_check
    _
  $region11: #{simple_lstm_forward.1} parent=0 // pred_check_branch
    %23 = sbr.rel (0) target = $region13
  $region12: #{simple_lstm_forward.1} parent=0 // pred_region
    _
  $region13: #{simple_lstm_forward.1} parent=0 // pred_fallthru
    _
  // Predicated region
  $region14: #{simple_lstm_forward.1} parent=0 // pred_check
    _
  $region15: #{simple_lstm_forward.1} parent=0 // pred_check_branch
    %25 = sbr.rel (0) target = $region17
  $region16: #{simple_lstm_forward.1} parent=0 // pred_region
    _
  $region17: #{simple_lstm_forward.1} parent=0 // pred_fallthru
    _
  // Predicated region
  $region18: #{simple_lstm_forward.1} parent=0 // pred_check
    _
  $region19: #{simple_lstm_forward.1} parent=0 // pred_check_branch
    %27 = sbr.rel (0) target = $region21
  $region20: #{simple_lstm_forward.1} parent=0 // pred_region
    _
  $region21: #{simple_lstm_forward.1} parent=0 // pred_fallthru
    _
  // Predicated region
  $region22: #{simple_lstm_forward.1} parent=0 // pred_check
    _
  $region23: #{simple_lstm_forward.1} parent=0 // pred_check_branch
    %29 = sbr.rel (0) target = $region25
  $region24: #{simple_lstm_forward.1} parent=0 // pred_region
    _
  $region25: #{simple_lstm_forward.1} parent=0 // pred_fallthru
    _
  // Predicated region
  $region26: #{simple_lstm_forward.1} parent=0 // pred_check
    _
  $region27: #{simple_lstm_forward.1} parent=0 // pred_check_branch
    %31 = sbr.rel (0) target = $region29
  $region28: #{simple_lstm_forward.1} parent=0 // pred_region
    _
  $region29: #{simple_lstm_forward.1} parent=0 // pred_fallthru
    _
  // Predicated region
  $region30: #{simple_lstm_forward.1} parent=0 // pred_check
    _
  $region31: #{simple_lstm_forward.1} parent=0 // pred_check_branch
    %33 = sbr.rel (0) target = $region33
  $region32: #{simple_lstm_forward.1} parent=0 // pred_region
    _
  $region33: #{simple_lstm_forward.1} parent=0 // pred_fallthru
    _
  // Predicated region
  $region34: #{simple_lstm_forward.1} parent=0 // pred_check
    _
  $region35: #{simple_lstm_forward.1} parent=0 // pred_check_branch
    %35 = sbr.rel (0) target = $region37
  $region36: #{simple_lstm_forward.1} parent=0 // pred_region
    _
  $region37: #{simple_lstm_forward.1} parent=0 // pred_fallthru
    _
  // Predicated region
  $region38: #{simple_lstm_forward.1} parent=0 // pred_check
    _
  $region39: #{simple_lstm_forward.1} parent=0 // pred_check_branch
    %37 = sbr.rel (0) target = $region41
  $region40: #{simple_lstm_forward.1} parent=0 // pred_region
    _
  $region41: #{simple_lstm_forward.1} parent=0 // pred_fallthru
    _
  // Predicated region
  $region42: #{simple_lstm_forward.1} parent=0 // pred_check
    _
  $region43: #{simple_lstm_forward.1} parent=0 // pred_check_branch
    %39 = sbr.rel (0) target = $region45
  $region44: #{simple_lstm_forward.1} parent=0 // pred_region
    _
  $region45: #{simple_lstm_forward.1} parent=0 // pred_fallthru
    _
  // Predicated region
  $region46: #{simple_lstm_forward.1} parent=0 // pred_check
    _
  $region47: #{simple_lstm_forward.1} parent=0 // pred_check_branch
    %41 = sbr.rel (0) target = $region49
  $region48: #{simple_lstm_forward.1} parent=0 // pred_region
    _
  $region49: #{simple_lstm_forward.1} parent=0 // pred_fallthru
    _
  // Predicated region
  $region50: #{simple_lstm_forward.1} parent=0 // pred_check
    _
  $region51: #{simple_lstm_forward.1} parent=0 // pred_check_branch
    %43 = sbr.rel (0) target = $region53
  $region52: #{simple_lstm_forward.1} parent=0 // pred_region
    _
  $region53: #{simple_lstm_forward.1} parent=0 // pred_fallthru
    _
  %v44 = vld [vmem:[%s0] sm:$0xff]
  %v45 = vld [vmem:[%s0 + $0x8] sm:$0xff]
  %v46 = vld [vmem:[%s0 + $0x10] sm:$0xff]
  %v47 = vld [vmem:[%s0 + $0x18] sm:$0xff]
  %v48 = vld [vmem:[%s0 + $0x20] sm:$0xff]
  %v49 = vld [vmem:[%s0 + $0x28] sm:$0xff]
  %v50 = vld [vmem:[%s0 + $0x30] sm:$0xff]
  %v51 = vld [vmem:[%s0 + $0x38] sm:$0xff]
  %v52 = vld [vmem:[%s1] sm:$0xff]
  %v53 = vld [vmem:[%s1 + $0x8] sm:$0xff]
  %v54 = vld [vmem:[%s2] sm:$0xff]
  %v55 = vld [vmem:[%s2 + $0x8] sm:$0xff]
  %v56 = vld [vmem:[%s2 + $0x10] sm:$0xff]
  %v57 = vld [vmem:[%s2 + $0x18] sm:$0xff]
  %v58 = vld [vmem:[%s3] sm:$0x1]
  %v60 = vlaneseq
  %v61 = vshrl.u32 %v60, 7
  %v62 = vsub.s32 0, %v61
  %v63 = vrot.slane %v58, %v62
  %vm65 = vcmask 130048
  %v67 = vsel %vm65, %v44, 0
  %v70 = vsel %vm65, %v45, 0
  %v73 = vsel %vm65, %v46, 0
  %v76 = vsel %vm65, %v47, 0
  %v79 = vsel %vm65, %v48, 0
  %v82 = vsel %vm65, %v49, 0
  %v85 = vsel %vm65, %v50, 0
  %v88 = vsel %vm65, %v51, 0
  %90 = vmatprep.subr.mxu0 0.0
  %91 = vmatpush1.msra.mxu0 %v52
  %92 = vmatprep.subr.mxu0 0.0
  %93 = vmatpush1.msra.mxu0 %v53
  %94 = vmatprep.subr.mxu0 0.0
  %95 = vmatpush1.msra.mxu0 0.0
  %96 = vmatprep.subr.mxu0 0.0
  %97 = vmatpush1.msra.mxu0 0.0
  %98 = vmatprep.subr.mxu0 0.0
  %99 = vmatpush1.msra.mxu0 0.0
  %100 = vmatprep.subr.mxu0 0.0
  %101 = vmatpush1.msra.mxu0 0.0
  %102 = vmatprep.subr.mxu0 0.0
  %103 = vmatpush1.msra.mxu0 0.0
  %104 = vmatprep.subr.mxu0 0.0
  %105 = vmatpush1.msra.mxu0 0.0
  %106 = vmatprep.subr.mxu0 0.0
  %107 = vmatpush1.msra.mxu0 0.0
  %108 = vmatprep.subr.mxu0 0.0
  %109 = vmatpush1.msra.mxu0 0.0
  %110 = vmatprep.subr.mxu0 0.0
  %111 = vmatpush1.msra.mxu0 0.0
  %112 = vmatprep.subr.mxu0 0.0
  %113 = vmatpush1.msra.mxu0 0.0
  %114 = vmatprep.subr.mxu0 0.0
  %115 = vmatpush1.msra.mxu0 0.0
  %116 = vmatprep.subr.mxu0 0.0
  %117 = vmatpush1.msra.mxu0 0.0
  %118 = vmatprep.subr.mxu0 0.0
  %119 = vmatpush1.msra.mxu0 0.0
  %120 = vmatprep.subr.mxu0 0.0
  %121 = vmatpush1.msra.mxu0 0.0
  %122 = vmatprep.subr.mxu0 0.0
  %123 = vmatpush1.msra.mxu0 0.0
  %124 = vmatprep.subr.mxu0 0.0
  %125 = vmatpush1.msra.mxu0 0.0
  %126 = vmatprep.subr.mxu0 0.0
  %127 = vmatpush1.msra.mxu0 0.0
  %128 = vmatprep.subr.mxu0 0.0
  %129 = vmatpush1.msra.mxu0 0.0
  %130 = vmatprep.subr.mxu0 0.0
  %131 = vmatpush1.msra.mxu0 0.0
  %132 = vmatprep.subr.mxu0 0.0
  %133 = vmatpush1.msra.mxu0 0.0
  %134 = vmatprep.subr.mxu0 0.0
  %135 = vmatpush1.msra.mxu0 0.0
  %136 = vmatprep.subr.mxu0 0.0
  %137 = vmatpush1.msra.mxu0 0.0
  %138 = vmatprep.subr.mxu0 0.0
  %139 = vmatpush1.msra.mxu0 0.0
  %140 = vmatprep.subr.mxu0 0.0
  %141 = vmatpush1.msra.mxu0 0.0
  %142 = vmatprep.subr.mxu0 0.0
  %143 = vmatpush1.msra.mxu0 0.0
  %144 = vmatprep.subr.mxu0 0.0
  %145 = vmatpush1.msra.mxu0 0.0
  %146 = vmatprep.subr.mxu0 0.0
  %147 = vmatpush1.msra.mxu0 0.0
  %148 = vmatprep.subr.mxu0 0.0
  %149 = vmatpush1.msra.mxu0 0.0
  %150 = vmatprep.subr.mxu0 0.0
  %151 = vmatpush1.msra.mxu0 0.0
  %152 = vmatprep.subr.mxu0 0.0
  %153 = vmatpush1.msra.mxu0 0.0
  %154 = vmatprep.mubr.f32.mxu0 0.0
  %155 = vmatmul.mubr.f32.gmra.mrb[0].mxu0 %v67
  %v156 = vpop.f32.mrb[0].mxu0
  %v157 = vadd.f32 %v63, %v156
  %v158 = vpop.f32.mrb[0].mxu0
  %159 = vmatprep.mubr.f32.mxu0 0.0
  %160 = vmatmul.mubr.f32.gmra.mrb[0].mxu0 %v70
  %v161 = vpop.f32.mrb[0].mxu0
  %v162 = vadd.f32 %v63, %v161
  %v163 = vpop.f32.mrb[0].mxu0
  %164 = vmatprep.mubr.f32.mxu0 0.0
  %165 = vmatmul.mubr.f32.gmra.mrb[0].mxu0 %v73
  %v166 = vpop.f32.mrb[0].mxu0
  %v167 = vadd.f32 %v63, %v166
  %v168 = vpop.f32.mrb[0].mxu0
  %169 = vmatprep.mubr.f32.mxu0 0.0
  %170 = vmatmul.mubr.f32.gmra.mrb[0].mxu0 %v76
  %v171 = vpop.f32.mrb[0].mxu0
  %v172 = vadd.f32 %v63, %v171
  %v173 = vpop.f32.mrb[0].mxu0
  %174 = vmatprep.mubr.f32.mxu0 0.0
  %175 = vmatmul.mubr.f32.gmra.mrb[0].mxu0 %v79
  %v176 = vpop.f32.mrb[0].mxu0
  %v177 = vadd.f32 %v63, %v176
  %v178 = vpop.f32.mrb[0].mxu0
  %179 = vmatprep.mubr.f32.mxu0 0.0
  %180 = vmatmul.mubr.f32.gmra.mrb[0].mxu0 %v82
  %v181 = vpop.f32.mrb[0].mxu0
  %v182 = vadd.f32 %v63, %v181
  %v183 = vpop.f32.mrb[0].mxu0
  %184 = vmatprep.mubr.f32.mxu0 0.0
  %185 = vmatmul.mubr.f32.gmra.mrb[0].mxu0 %v85
  %v186 = vpop.f32.mrb[0].mxu0
  %v187 = vadd.f32 %v63, %v186
  %v188 = vpop.f32.mrb[0].mxu0
  %189 = vmatprep.mubr.f32.mxu0 0.0
  %190 = vmatmul.mubr.f32.gmra.mrb[0].mxu0 %v88
  %v191 = vpop.f32.mrb[0].mxu0
  %v192 = vadd.f32 %v63, %v191
  %v193 = vpop.f32.mrb[0].mxu0
  %194 = vdwg.mxu0
  %vm195 = vcmask 261120
  %v197 = vsel %vm195, 0.0, 0
  %199 = vmatprep.subr.mxu0 0.0
  %200 = vmatpush1.msra.mxu0 %v54
  %201 = vmatprep.subr.mxu0 0.0
  %202 = vmatpush1.msra.mxu0 %v55
  %203 = vmatprep.subr.mxu0 0.0
  %204 = vmatpush1.msra.mxu0 %v56
  %205 = vmatprep.subr.mxu0 0.0
  %206 = vmatpush1.msra.mxu0 %v57
  %207 = vmatprep.subr.mxu0 0.0
  %208 = vmatpush1.msra.mxu0 0.0
  %209 = vmatprep.subr.mxu0 0.0
  %210 = vmatpush1.msra.mxu0 0.0
  %211 = vmatprep.subr.mxu0 0.0
  %212 = vmatpush1.msra.mxu0 0.0
  %213 = vmatprep.subr.mxu0 0.0
  %214 = vmatpush1.msra.mxu0 0.0
  %215 = vmatprep.subr.mxu0 0.0
  %216 = vmatpush1.msra.mxu0 0.0
  %217 = vmatprep.subr.mxu0 0.0
  %218 = vmatpush1.msra.mxu0 0.0
  %219 = vmatprep.subr.mxu0 0.0
  %220 = vmatpush1.msra.mxu0 0.0
  %221 = vmatprep.subr.mxu0 0.0
  %222 = vmatpush1.msra.mxu0 0.0
  %223 = vmatprep.subr.mxu0 0.0
  %224 = vmatpush1.msra.mxu0 0.0
  %225 = vmatprep.subr.mxu0 0.0
  %226 = vmatpush1.msra.mxu0 0.0
  %227 = vmatprep.subr.mxu0 0.0
  %228 = vmatpush1.msra.mxu0 0.0
  %229 = vmatprep.subr.mxu0 0.0
  %230 = vmatpush1.msra.mxu0 0.0
  %231 = vmatprep.subr.mxu0 0.0
  %232 = vmatpush1.msra.mxu0 0.0
  %233 = vmatprep.subr.mxu0 0.0
  %234 = vmatpush1.msra.mxu0 0.0
  %235 = vmatprep.subr.mxu0 0.0
  %236 = vmatpush1.msra.mxu0 0.0
  %237 = vmatprep.subr.mxu0 0.0
  %238 = vmatpush1.msra.mxu0 0.0
  %239 = vmatprep.subr.mxu0 0.0
  %240 = vmatpush1.msra.mxu0 0.0
  %241 = vmatprep.subr.mxu0 0.0
  %242 = vmatpush1.msra.mxu0 0.0
  %243 = vmatprep.subr.mxu0 0.0
  %244 = vmatpush1.msra.mxu0 0.0
  %245 = vmatprep.subr.mxu0 0.0
  %246 = vmatpush1.msra.mxu0 0.0
  %247 = vmatprep.subr.mxu0 0.0
  %248 = vmatpush1.msra.mxu0 0.0
  %249 = vmatprep.subr.mxu0 0.0
  %250 = vmatpush1.msra.mxu0 0.0
  %251 = vmatprep.subr.mxu0 0.0
  %252 = vmatpush1.msra.mxu0 0.0
  %253 = vmatprep.subr.mxu0 0.0
  %254 = vmatpush1.msra.mxu0 0.0
  %255 = vmatprep.subr.mxu0 0.0
  %256 = vmatpush1.msra.mxu0 0.0
  %257 = vmatprep.subr.mxu0 0.0
  %258 = vmatpush1.msra.mxu0 0.0
  %259 = vmatprep.subr.mxu0 0.0
  %260 = vmatpush1.msra.mxu0 0.0
  %261 = vmatprep.subr.mxu0 0.0
  %262 = vmatpush1.msra.mxu0 0.0
  %263 = vmatprep.mubr.f32.mxu0 0.0
  %264 = vmatmul.mubr.f32.gmra.mrb[0].mxu0 %v197
  %v265 = vpop.f32.mrb[0].mxu0
  %v266 = vadd.f32 0.0, %v265
  %v267 = vpop.f32.mrb[0].mxu0
  %268 = vdwg.mxu0
  %v269 = vadd.f32 %v157, %v266
  %v270 = vxor.u32 %v269, 2147483648
  %v271 = vmul.f32 %v270, 1.442695
  %v272 = vpow.pop %v271
  %v273 = vadd.f32 %v272, 1.0
  %v274 = vrcp.pop %v273
  %v275 = vmul.f32 1.0, %v274
  %v276 = vtanh.pop %v269
  %v277 = vmul.f32 %v275, 0.0
  %279 = vrot.lane.b32.xlu0 %v276, 64
  %v280 = vpop.permute.xlu0 %279
  %v282 = vmul.f32 %v275, %v280
  %284 = vrot.lane.b32.xlu0 %v282, 32
  %v285 = vpop.permute.xlu0 %284
  %v287 = vadd.f32 %v277, %v285
  %v288 = vtanh.pop %v287
  %290 = vrot.lane.b32.xlu0 %v288, 64
  %v291 = vpop.permute.xlu0 %290
  %v293 = vmul.f32 %v275, %v291
  %295 = vrot.lane.b32.xlu0 %v293, 32
  %v296 = vpop.permute.xlu0 %295
  %v297 = vsel %vm195, %v296, 0
  %299 = vmatprep.subr.mxu0 0.0
  %300 = vmatpush1.msra.mxu0 %v54
  %301 = vmatprep.subr.mxu0 0.0
  %302 = vmatpush1.msra.mxu0 %v55
  %303 = vmatprep.subr.mxu0 0.0
  %304 = vmatpush1.msra.mxu0 %v56
  %305 = vmatprep.subr.mxu0 0.0
  %306 = vmatpush1.msra.mxu0 %v57
  %307 = vmatprep.subr.mxu0 0.0
  %308 = vmatpush1.msra.mxu0 0.0
  %309 = vmatprep.subr.mxu0 0.0
  %310 = vmatpush1.msra.mxu0 0.0
  %311 = vmatprep.subr.mxu0 0.0
  %312 = vmatpush1.msra.mxu0 0.0
  %313 = vmatprep.subr.mxu0 0.0
  %314 = vmatpush1.msra.mxu0 0.0
  %315 = vmatprep.subr.mxu0 0.0
  %316 = vmatpush1.msra.mxu0 0.0
  %317 = vmatprep.subr.mxu0 0.0
  %318 = vmatpush1.msra.mxu0 0.0
  %319 = vmatprep.subr.mxu0 0.0
  %320 = vmatpush1.msra.mxu0 0.0
  %321 = vmatprep.subr.mxu0 0.0
  %322 = vmatpush1.msra.mxu0 0.0
  %323 = vmatprep.subr.mxu0 0.0
  %324 = vmatpush1.msra.mxu0 0.0
  %325 = vmatprep.subr.mxu0 0.0
  %326 = vmatpush1.msra.mxu0 0.0
  %327 = vmatprep.subr.mxu0 0.0
  %328 = vmatpush1.msra.mxu0 0.0
  %329 = vmatprep.subr.mxu0 0.0
  %330 = vmatpush1.msra.mxu0 0.0
  %331 = vmatprep.subr.mxu0 0.0
  %332 = vmatpush1.msra.mxu0 0.0
  %333 = vmatprep.subr.mxu0 0.0
  %334 = vmatpush1.msra.mxu0 0.0
  %335 = vmatprep.subr.mxu0 0.0
  %336 = vmatpush1.msra.mxu0 0.0
  %337 = vmatprep.subr.mxu0 0.0
  %338 = vmatpush1.msra.mxu0 0.0
  %339 = vmatprep.subr.mxu0 0.0
  %340 = vmatpush1.msra.mxu0 0.0
  %341 = vmatprep.subr.mxu0 0.0
  %342 = vmatpush1.msra.mxu0 0.0
  %343 = vmatprep.subr.mxu0 0.0
  %344 = vmatpush1.msra.mxu0 0.0
  %345 = vmatprep.subr.mxu0 0.0
  %346 = vmatpush1.msra.mxu0 0.0
  %347 = vmatprep.subr.mxu0 0.0
  %348 = vmatpush1.msra.mxu0 0.0
  %349 = vmatprep.subr.mxu0 0.0
  %350 = vmatpush1.msra.mxu0 0.0
  %351 = vmatprep.subr.mxu0 0.0
  %352 = vmatpush1.msra.mxu0 0.0
  %353 = vmatprep.subr.mxu0 0.0
  %354 = vmatpush1.msra.mxu0 0.0
  %355 = vmatprep.subr.mxu0 0.0
  %356 = vmatpush1.msra.mxu0 0.0
  %357 = vmatprep.subr.mxu0 0.0
  %358 = vmatpush1.msra.mxu0 0.0
  %359 = vmatprep.subr.mxu0 0.0
  %360 = vmatpush1.msra.mxu0 0.0
  %361 = vmatprep.subr.mxu0 0.0
  %362 = vmatpush1.msra.mxu0 0.0
  %363 = vmatprep.mubr.f32.mxu0 0.0
  %364 = vmatmul.mubr.f32.gmra.mrb[0].mxu0 %v297
  %v365 = vpop.f32.mrb[0].mxu0
  %v366 = vadd.f32 0.0, %v365
  %v367 = vpop.f32.mrb[0].mxu0
  %368 = vdwg.mxu0
  %v369 = vadd.f32 %v162, %v366
  %v370 = vxor.u32 %v369, 2147483648
  %v371 = vmul.f32 %v370, 1.442695
  %v372 = vpow.pop %v371
  %v373 = vadd.f32 %v372, 1.0
  %v374 = vrcp.pop %v373
  %v375 = vmul.f32 1.0, %v374
  %v376 = vtanh.pop %v369
  %v377 = vmul.f32 %v375, %v287
  %379 = vrot.lane.b32.xlu0 %v376, 64
  %v380 = vpop.permute.xlu0 %379
  %v382 = vmul.f32 %v375, %v380
  %384 = vrot.lane.b32.xlu0 %v382, 32
  %v385 = vpop.permute.xlu0 %384
  %v387 = vadd.f32 %v377, %v385
  %v388 = vtanh.pop %v387
  %390 = vrot.lane.b32.xlu0 %v388, 64
  %v391 = vpop.permute.xlu0 %390
  %v393 = vmul.f32 %v375, %v391
  %395 = vrot.lane.b32.xlu0 %v393, 32
  %v396 = vpop.permute.xlu0 %395
  %v397 = vsel %vm195, %v396, 0
  %399 = vmatprep.subr.mxu0 0.0
  %400 = vmatpush1.msra.mxu0 %v54
  %401 = vmatprep.subr.mxu0 0.0
  %402 = vmatpush1.msra.mxu0 %v55
  %403 = vmatprep.subr.mxu0 0.0
  %404 = vmatpush1.msra.mxu0 %v56
  %405 = vmatprep.subr.mxu0 0.0
  %406 = vmatpush1.msra.mxu0 %v57
  %407 = vmatprep.subr.mxu0 0.0
  %408 = vmatpush1.msra.mxu0 0.0
  %409 = vmatprep.subr.mxu0 0.0
  %410 = vmatpush1.msra.mxu0 0.0
  %411 = vmatprep.subr.mxu0 0.0
  %412 = vmatpush1.msra.mxu0 0.0
  %413 = vmatprep.subr.mxu0 0.0
  %414 = vmatpush1.msra.mxu0 0.0
  %415 = vmatprep.subr.mxu0 0.0
  %416 = vmatpush1.msra.mxu0 0.0
  %417 = vmatprep.subr.mxu0 0.0
  %418 = vmatpush1.msra.mxu0 0.0
  %419 = vmatprep.subr.mxu0 0.0
  %420 = vmatpush1.msra.mxu0 0.0
  %421 = vmatprep.subr.mxu0 0.0
  %422 = vmatpush1.msra.mxu0 0.0
  %423 = vmatprep.subr.mxu0 0.0
  %424 = vmatpush1.msra.mxu0 0.0
  %425 = vmatprep.subr.mxu0 0.0
  %426 = vmatpush1.msra.mxu0 0.0
  %427 = vmatprep.subr.mxu0 0.0
  %428 = vmatpush1.msra.mxu0 0.0
  %429 = vmatprep.subr.mxu0 0.0
  %430 = vmatpush1.msra.mxu0 0.0
  %431 = vmatprep.subr.mxu0 0.0
  %432 = vmatpush1.msra.mxu0 0.0
  %433 = vmatprep.subr.mxu0 0.0
  %434 = vmatpush1.msra.mxu0 0.0
  %435 = vmatprep.subr.mxu0 0.0
  %436 = vmatpush1.msra.mxu0 0.0
  %437 = vmatprep.subr.mxu0 0.0
  %438 = vmatpush1.msra.mxu0 0.0
  %439 = vmatprep.subr.mxu0 0.0
  %440 = vmatpush1.msra.mxu0 0.0
  %441 = vmatprep.subr.mxu0 0.0
  %442 = vmatpush1.msra.mxu0 0.0
  %443 = vmatprep.subr.mxu0 0.0
  %444 = vmatpush1.msra.mxu0 0.0
  %445 = vmatprep.subr.mxu0 0.0
  %446 = vmatpush1.msra.mxu0 0.0
  %447 = vmatprep.subr.mxu0 0.0
  %448 = vmatpush1.msra.mxu0 0.0
  %449 = vmatprep.subr.mxu0 0.0
  %450 = vmatpush1.msra.mxu0 0.0
  %451 = vmatprep.subr.mxu0 0.0
  %452 = vmatpush1.msra.mxu0 0.0
  %453 = vmatprep.subr.mxu0 0.0
  %454 = vmatpush1.msra.mxu0 0.0
  %455 = vmatprep.subr.mxu0 0.0
  %456 = vmatpush1.msra.mxu0 0.0
  %457 = vmatprep.subr.mxu0 0.0
  %458 = vmatpush1.msra.mxu0 0.0
  %459 = vmatprep.subr.mxu0 0.0
  %460 = vmatpush1.msra.mxu0 0.0
  %461 = vmatprep.subr.mxu0 0.0
  %462 = vmatpush1.msra.mxu0 0.0
  %463 = vmatprep.mubr.f32.mxu0 0.0
  %464 = vmatmul.mubr.f32.gmra.mrb[0].mxu0 %v397
  %v465 = vpop.f32.mrb[0].mxu0
  %v466 = vadd.f32 0.0, %v465
  %v467 = vpop.f32.mrb[0].mxu0
  %468 = vdwg.mxu0
  %v469 = vadd.f32 %v167, %v466
  %v470 = vxor.u32 %v469, 2147483648
  %v471 = vmul.f32 %v470, 1.442695
  %v472 = vpow.pop %v471
  %v473 = vadd.f32 %v472, 1.0
  %v474 = vrcp.pop %v473
  %v475 = vmul.f32 1.0, %v474
  %v476 = vtanh.pop %v469
  %v477 = vmul.f32 %v475, %v387
  %479 = vrot.lane.b32.xlu0 %v476, 64
  %v480 = vpop.permute.xlu0 %479
  %v482 = vmul.f32 %v475, %v480
  %484 = vrot.lane.b32.xlu0 %v482, 32
  %v485 = vpop.permute.xlu0 %484
  %v487 = vadd.f32 %v477, %v485
  %v488 = vtanh.pop %v487
  %490 = vrot.lane.b32.xlu0 %v488, 64
  %v491 = vpop.permute.xlu0 %490
  %v493 = vmul.f32 %v475, %v491
  %495 = vrot.lane.b32.xlu0 %v493, 32
  %v496 = vpop.permute.xlu0 %495
  %v497 = vsel %vm195, %v496, 0
  %499 = vmatprep.subr.mxu0 0.0
  %500 = vmatpush1.msra.mxu0 %v54
  %501 = vmatprep.subr.mxu0 0.0
  %502 = vmatpush1.msra.mxu0 %v55
  %503 = vmatprep.subr.mxu0 0.0
  %504 = vmatpush1.msra.mxu0 %v56
  %505 = vmatprep.subr.mxu0 0.0
  %506 = vmatpush1.msra.mxu0 %v57
  %507 = vmatprep.subr.mxu0 0.0
  %508 = vmatpush1.msra.mxu0 0.0
  %509 = vmatprep.subr.mxu0 0.0
  %510 = vmatpush1.msra.mxu0 0.0
  %511 = vmatprep.subr.mxu0 0.0
  %512 = vmatpush1.msra.mxu0 0.0
  %513 = vmatprep.subr.mxu0 0.0
  %514 = vmatpush1.msra.mxu0 0.0
  %515 = vmatprep.subr.mxu0 0.0
  %516 = vmatpush1.msra.mxu0 0.0
  %517 = vmatprep.subr.mxu0 0.0
  %518 = vmatpush1.msra.mxu0 0.0
  %519 = vmatprep.subr.mxu0 0.0
  %520 = vmatpush1.msra.mxu0 0.0
  %521 = vmatprep.subr.mxu0 0.0
  %522 = vmatpush1.msra.mxu0 0.0
  %523 = vmatprep.subr.mxu0 0.0
  %524 = vmatpush1.msra.mxu0 0.0
  %525 = vmatprep.subr.mxu0 0.0
  %526 = vmatpush1.msra.mxu0 0.0
  %527 = vmatprep.subr.mxu0 0.0
  %528 = vmatpush1.msra.mxu0 0.0
  %529 = vmatprep.subr.mxu0 0.0
  %530 = vmatpush1.msra.mxu0 0.0
  %531 = vmatprep.subr.mxu0 0.0
  %532 = vmatpush1.msra.mxu0 0.0
  %533 = vmatprep.subr.mxu0 0.0
  %534 = vmatpush1.msra.mxu0 0.0
  %535 = vmatprep.subr.mxu0 0.0
  %536 = vmatpush1.msra.mxu0 0.0
  %537 = vmatprep.subr.mxu0 0.0
  %538 = vmatpush1.msra.mxu0 0.0
  %539 = vmatprep.subr.mxu0 0.0
  %540 = vmatpush1.msra.mxu0 0.0
  %541 = vmatprep.subr.mxu0 0.0
  %542 = vmatpush1.msra.mxu0 0.0
  %543 = vmatprep.subr.mxu0 0.0
  %544 = vmatpush1.msra.mxu0 0.0
  %545 = vmatprep.subr.mxu0 0.0
  %546 = vmatpush1.msra.mxu0 0.0
  %547 = vmatprep.subr.mxu0 0.0
  %548 = vmatpush1.msra.mxu0 0.0
  %549 = vmatprep.subr.mxu0 0.0
  %550 = vmatpush1.msra.mxu0 0.0
  %551 = vmatprep.subr.mxu0 0.0
  %552 = vmatpush1.msra.mxu0 0.0
  %553 = vmatprep.subr.mxu0 0.0
  %554 = vmatpush1.msra.mxu0 0.0
  %555 = vmatprep.subr.mxu0 0.0
  %556 = vmatpush1.msra.mxu0 0.0
  %557 = vmatprep.subr.mxu0 0.0
  %558 = vmatpush1.msra.mxu0 0.0
  %559 = vmatprep.subr.mxu0 0.0
  %560 = vmatpush1.msra.mxu0 0.0
  %561 = vmatprep.subr.mxu0 0.0
  %562 = vmatpush1.msra.mxu0 0.0
  %563 = vmatprep.mubr.f32.mxu0 0.0
  %564 = vmatmul.mubr.f32.gmra.mrb[0].mxu0 %v497
  %v565 = vpop.f32.mrb[0].mxu0
  %v566 = vadd.f32 0.0, %v565
  %v567 = vpop.f32.mrb[0].mxu0
  %568 = vdwg.mxu0
  %v569 = vadd.f32 %v172, %v566
  %v570 = vxor.u32 %v569, 2147483648
  %v571 = vmul.f32 %v570, 1.442695
  %v572 = vpow.pop %v571
  %v573 = vadd.f32 %v572, 1.0
  %v574 = vrcp.pop %v573
  %v575 = vmul.f32 1.0, %v574
  %v576 = vtanh.pop %v569
  %v577 = vmul.f32 %v575, %v487
  %579 = vrot.lane.b32.xlu0 %v576, 64
  %v580 = vpop.permute.xlu0 %579
  %v582 = vmul.f32 %v575, %v580
  %584 = vrot.lane.b32.xlu0 %v582, 32
  %v585 = vpop.permute.xlu0 %584
  %v587 = vadd.f32 %v577, %v585
  %v588 = vtanh.pop %v587
  %590 = vrot.lane.b32.xlu0 %v588, 64
  %v591 = vpop.permute.xlu0 %590
  %v593 = vmul.f32 %v575, %v591
  %595 = vrot.lane.b32.xlu0 %v593, 32
  %v596 = vpop.permute.xlu0 %595
  %v597 = vsel %vm195, %v596, 0
  %599 = vmatprep.subr.mxu0 0.0
  %600 = vmatpush1.msra.mxu0 %v54
  %601 = vmatprep.subr.mxu0 0.0
  %602 = vmatpush1.msra.mxu0 %v55
  %603 = vmatprep.subr.mxu0 0.0
  %604 = vmatpush1.msra.mxu0 %v56
  %605 = vmatprep.subr.mxu0 0.0
  %606 = vmatpush1.msra.mxu0 %v57
  %607 = vmatprep.subr.mxu0 0.0
  %608 = vmatpush1.msra.mxu0 0.0
  %609 = vmatprep.subr.mxu0 0.0
  %610 = vmatpush1.msra.mxu0 0.0
  %611 = vmatprep.subr.mxu0 0.0
  %612 = vmatpush1.msra.mxu0 0.0
  %613 = vmatprep.subr.mxu0 0.0
  %614 = vmatpush1.msra.mxu0 0.0
  %615 = vmatprep.subr.mxu0 0.0
  %616 = vmatpush1.msra.mxu0 0.0
  %617 = vmatprep.subr.mxu0 0.0
  %618 = vmatpush1.msra.mxu0 0.0
  %619 = vmatprep.subr.mxu0 0.0
  %620 = vmatpush1.msra.mxu0 0.0
  %621 = vmatprep.subr.mxu0 0.0
  %622 = vmatpush1.msra.mxu0 0.0
  %623 = vmatprep.subr.mxu0 0.0
  %624 = vmatpush1.msra.mxu0 0.0
  %625 = vmatprep.subr.mxu0 0.0
  %626 = vmatpush1.msra.mxu0 0.0
  %627 = vmatprep.subr.mxu0 0.0
  %628 = vmatpush1.msra.mxu0 0.0
  %629 = vmatprep.subr.mxu0 0.0
  %630 = vmatpush1.msra.mxu0 0.0
  %631 = vmatprep.subr.mxu0 0.0
  %632 = vmatpush1.msra.mxu0 0.0
  %633 = vmatprep.subr.mxu0 0.0
  %634 = vmatpush1.msra.mxu0 0.0
  %635 = vmatprep.subr.mxu0 0.0
  %636 = vmatpush1.msra.mxu0 0.0
  %637 = vmatprep.subr.mxu0 0.0
  %638 = vmatpush1.msra.mxu0 0.0
  %639 = vmatprep.subr.mxu0 0.0
  %640 = vmatpush1.msra.mxu0 0.0
  %641 = vmatprep.subr.mxu0 0.0
  %642 = vmatpush1.msra.mxu0 0.0
  %643 = vmatprep.subr.mxu0 0.0
  %644 = vmatpush1.msra.mxu0 0.0
  %645 = vmatprep.subr.mxu0 0.0
  %646 = vmatpush1.msra.mxu0 0.0
  %647 = vmatprep.subr.mxu0 0.0
  %648 = vmatpush1.msra.mxu0 0.0
  %649 = vmatprep.subr.mxu0 0.0
  %650 = vmatpush1.msra.mxu0 0.0
  %651 = vmatprep.subr.mxu0 0.0
  %652 = vmatpush1.msra.mxu0 0.0
  %653 = vmatprep.subr.mxu0 0.0
  %654 = vmatpush1.msra.mxu0 0.0
  %655 = vmatprep.subr.mxu0 0.0
  %656 = vmatpush1.msra.mxu0 0.0
  %657 = vmatprep.subr.mxu0 0.0
  %658 = vmatpush1.msra.mxu0 0.0
  %659 = vmatprep.subr.mxu0 0.0
  %660 = vmatpush1.msra.mxu0 0.0
  %661 = vmatprep.subr.mxu0 0.0
  %662 = vmatpush1.msra.mxu0 0.0
  %663 = vmatprep.mubr.f32.mxu0 0.0
  %664 = vmatmul.mubr.f32.gmra.mrb[0].mxu0 %v597
  %v665 = vpop.f32.mrb[0].mxu0
  %v666 = vadd.f32 0.0, %v665
  %v667 = vpop.f32.mrb[0].mxu0
  %668 = vdwg.mxu0
  %v669 = vadd.f32 %v177, %v666
  %v670 = vxor.u32 %v669, 2147483648
  %v671 = vmul.f32 %v670, 1.442695
  %v672 = vpow.pop %v671
  %v673 = vadd.f32 %v672, 1.0
  %v674 = vrcp.pop %v673
  %v675 = vmul.f32 1.0, %v674
  %v676 = vtanh.pop %v669
  %v677 = vmul.f32 %v675, %v587
  %679 = vrot.lane.b32.xlu0 %v676, 64
  %v680 = vpop.permute.xlu0 %679
  %v682 = vmul.f32 %v675, %v680
  %684 = vrot.lane.b32.xlu0 %v682, 32
  %v685 = vpop.permute.xlu0 %684
  %v687 = vadd.f32 %v677, %v685
  %v688 = vtanh.pop %v687
  %690 = vrot.lane.b32.xlu0 %v688, 64
  %v691 = vpop.permute.xlu0 %690
  %v693 = vmul.f32 %v675, %v691
  %695 = vrot.lane.b32.xlu0 %v693, 32
  %v696 = vpop.permute.xlu0 %695
  %v697 = vsel %vm195, %v696, 0
  %699 = vmatprep.subr.mxu0 0.0
  %700 = vmatpush1.msra.mxu0 %v54
  %701 = vmatprep.subr.mxu0 0.0
  %702 = vmatpush1.msra.mxu0 %v55
  %703 = vmatprep.subr.mxu0 0.0
  %704 = vmatpush1.msra.mxu0 %v56
  %705 = vmatprep.subr.mxu0 0.0
  %706 = vmatpush1.msra.mxu0 %v57
  %707 = vmatprep.subr.mxu0 0.0
  %708 = vmatpush1.msra.mxu0 0.0
  %709 = vmatprep.subr.mxu0 0.0
  %710 = vmatpush1.msra.mxu0 0.0
  %711 = vmatprep.subr.mxu0 0.0
  %712 = vmatpush1.msra.mxu0 0.0
  %713 = vmatprep.subr.mxu0 0.0
  %714 = vmatpush1.msra.mxu0 0.0
  %715 = vmatprep.subr.mxu0 0.0
  %716 = vmatpush1.msra.mxu0 0.0
  %717 = vmatprep.subr.mxu0 0.0
  %718 = vmatpush1.msra.mxu0 0.0
  %719 = vmatprep.subr.mxu0 0.0
  %720 = vmatpush1.msra.mxu0 0.0
  %721 = vmatprep.subr.mxu0 0.0
  %722 = vmatpush1.msra.mxu0 0.0
  %723 = vmatprep.subr.mxu0 0.0
  %724 = vmatpush1.msra.mxu0 0.0
  %725 = vmatprep.subr.mxu0 0.0
  %726 = vmatpush1.msra.mxu0 0.0
  %727 = vmatprep.subr.mxu0 0.0
  %728 = vmatpush1.msra.mxu0 0.0
  %729 = vmatprep.subr.mxu0 0.0
  %730 = vmatpush1.msra.mxu0 0.0
  %731 = vmatprep.subr.mxu0 0.0
  %732 = vmatpush1.msra.mxu0 0.0
  %733 = vmatprep.subr.mxu0 0.0
  %734 = vmatpush1.msra.mxu0 0.0
  %735 = vmatprep.subr.mxu0 0.0
  %736 = vmatpush1.msra.mxu0 0.0
  %737 = vmatprep.subr.mxu0 0.0
  %738 = vmatpush1.msra.mxu0 0.0
  %739 = vmatprep.subr.mxu0 0.0
  %740 = vmatpush1.msra.mxu0 0.0
  %741 = vmatprep.subr.mxu0 0.0
  %742 = vmatpush1.msra.mxu0 0.0
  %743 = vmatprep.subr.mxu0 0.0
  %744 = vmatpush1.msra.mxu0 0.0
  %745 = vmatprep.subr.mxu0 0.0
  %746 = vmatpush1.msra.mxu0 0.0
  %747 = vmatprep.subr.mxu0 0.0
  %748 = vmatpush1.msra.mxu0 0.0
  %749 = vmatprep.subr.mxu0 0.0
  %750 = vmatpush1.msra.mxu0 0.0
  %751 = vmatprep.subr.mxu0 0.0
  %752 = vmatpush1.msra.mxu0 0.0
  %753 = vmatprep.subr.mxu0 0.0
  %754 = vmatpush1.msra.mxu0 0.0
  %755 = vmatprep.subr.mxu0 0.0
  %756 = vmatpush1.msra.mxu0 0.0
  %757 = vmatprep.subr.mxu0 0.0
  %758 = vmatpush1.msra.mxu0 0.0
  %759 = vmatprep.subr.mxu0 0.0
  %760 = vmatpush1.msra.mxu0 0.0
  %761 = vmatprep.subr.mxu0 0.0
  %762 = vmatpush1.msra.mxu0 0.0
  %763 = vmatprep.mubr.f32.mxu0 0.0
  %764 = vmatmul.mubr.f32.gmra.mrb[0].mxu0 %v697
  %v765 = vpop.f32.mrb[0].mxu0
  %v766 = vadd.f32 0.0, %v765
  %v767 = vpop.f32.mrb[0].mxu0
  %768 = vdwg.mxu0
  %v769 = vadd.f32 %v182, %v766
  %v770 = vxor.u32 %v769, 2147483648
  %v771 = vmul.f32 %v770, 1.442695
  %v772 = vpow.pop %v771
  %v773 = vadd.f32 %v772, 1.0
  %v774 = vrcp.pop %v773
  %v775 = vmul.f32 1.0, %v774
  %v776 = vtanh.pop %v769
  %v777 = vmul.f32 %v775, %v687
  %779 = vrot.lane.b32.xlu0 %v776, 64
  %v780 = vpop.permute.xlu0 %779
  %v782 = vmul.f32 %v775, %v780
  %784 = vrot.lane.b32.xlu0 %v782, 32
  %v785 = vpop.permute.xlu0 %784
  %v787 = vadd.f32 %v777, %v785
  %v788 = vtanh.pop %v787
  %790 = vrot.lane.b32.xlu0 %v788, 64
  %v791 = vpop.permute.xlu0 %790
  %v793 = vmul.f32 %v775, %v791
  %795 = vrot.lane.b32.xlu0 %v793, 32
  %v796 = vpop.permute.xlu0 %795
  %v797 = vsel %vm195, %v796, 0
  %799 = vmatprep.subr.mxu0 0.0
  %800 = vmatpush1.msra.mxu0 %v54
  %801 = vmatprep.subr.mxu0 0.0
  %802 = vmatpush1.msra.mxu0 %v55
  %803 = vmatprep.subr.mxu0 0.0
  %804 = vmatpush1.msra.mxu0 %v56
  %805 = vmatprep.subr.mxu0 0.0
  %806 = vmatpush1.msra.mxu0 %v57
  %807 = vmatprep.subr.mxu0 0.0
  %808 = vmatpush1.msra.mxu0 0.0
  %809 = vmatprep.subr.mxu0 0.0
  %810 = vmatpush1.msra.mxu0 0.0
  %811 = vmatprep.subr.mxu0 0.0
  %812 = vmatpush1.msra.mxu0 0.0
  %813 = vmatprep.subr.mxu0 0.0
  %814 = vmatpush1.msra.mxu0 0.0
  %815 = vmatprep.subr.mxu0 0.0
  %816 = vmatpush1.msra.mxu0 0.0
  %817 = vmatprep.subr.mxu0 0.0
  %818 = vmatpush1.msra.mxu0 0.0
  %819 = vmatprep.subr.mxu0 0.0
  %820 = vmatpush1.msra.mxu0 0.0
  %821 = vmatprep.subr.mxu0 0.0
  %822 = vmatpush1.msra.mxu0 0.0
  %823 = vmatprep.subr.mxu0 0.0
  %824 = vmatpush1.msra.mxu0 0.0
  %825 = vmatprep.subr.mxu0 0.0
  %826 = vmatpush1.msra.mxu0 0.0
  %827 = vmatprep.subr.mxu0 0.0
  %828 = vmatpush1.msra.mxu0 0.0
  %829 = vmatprep.subr.mxu0 0.0
  %830 = vmatpush1.msra.mxu0 0.0
  %831 = vmatprep.subr.mxu0 0.0
  %832 = vmatpush1.msra.mxu0 0.0
  %833 = vmatprep.subr.mxu0 0.0
  %834 = vmatpush1.msra.mxu0 0.0
  %835 = vmatprep.subr.mxu0 0.0
  %836 = vmatpush1.msra.mxu0 0.0
  %837 = vmatprep.subr.mxu0 0.0
  %838 = vmatpush1.msra.mxu0 0.0
  %839 = vmatprep.subr.mxu0 0.0
  %840 = vmatpush1.msra.mxu0 0.0
  %841 = vmatprep.subr.mxu0 0.0
  %842 = vmatpush1.msra.mxu0 0.0
  %843 = vmatprep.subr.mxu0 0.0
  %844 = vmatpush1.msra.mxu0 0.0
  %845 = vmatprep.subr.mxu0 0.0
  %846 = vmatpush1.msra.mxu0 0.0
  %847 = vmatprep.subr.mxu0 0.0
  %848 = vmatpush1.msra.mxu0 0.0
  %849 = vmatprep.subr.mxu0 0.0
  %850 = vmatpush1.msra.mxu0 0.0
  %851 = vmatprep.subr.mxu0 0.0
  %852 = vmatpush1.msra.mxu0 0.0
  %853 = vmatprep.subr.mxu0 0.0
  %854 = vmatpush1.msra.mxu0 0.0
  %855 = vmatprep.subr.mxu0 0.0
  %856 = vmatpush1.msra.mxu0 0.0
  %857 = vmatprep.subr.mxu0 0.0
  %858 = vmatpush1.msra.mxu0 0.0
  %859 = vmatprep.subr.mxu0 0.0
  %860 = vmatpush1.msra.mxu0 0.0
  %861 = vmatprep.subr.mxu0 0.0
  %862 = vmatpush1.msra.mxu0 0.0
  %863 = vmatprep.mubr.f32.mxu0 0.0
  %864 = vmatmul.mubr.f32.gmra.mrb[0].mxu0 %v797
  %v865 = vpop.f32.mrb[0].mxu0
  %v866 = vadd.f32 0.0, %v865
  %v867 = vpop.f32.mrb[0].mxu0
  %868 = vdwg.mxu0
  %v869 = vadd.f32 %v187, %v866
  %v870 = vxor.u32 %v869, 2147483648
  %v871 = vmul.f32 %v870, 1.442695
  %v872 = vpow.pop %v871
  %v873 = vadd.f32 %v872, 1.0
  %v874 = vrcp.pop %v873
  %v875 = vmul.f32 1.0, %v874
  %v876 = vtanh.pop %v869
  %v877 = vmul.f32 %v875, %v787
  %879 = vrot.lane.b32.xlu0 %v876, 64
  %v880 = vpop.permute.xlu0 %879
  %v882 = vmul.f32 %v875, %v880
  %884 = vrot.lane.b32.xlu0 %v882, 32
  %v885 = vpop.permute.xlu0 %884
  %v887 = vadd.f32 %v877, %v885
  %v888 = vtanh.pop %v887
  %890 = vrot.lane.b32.xlu0 %v888, 64
  %v891 = vpop.permute.xlu0 %890
  %v893 = vmul.f32 %v875, %v891
  %895 = vrot.lane.b32.xlu0 %v893, 32
  %v896 = vpop.permute.xlu0 %895
  %v897 = vsel %vm195, %v896, 0
  %899 = vmatprep.subr.mxu0 0.0
  %900 = vmatpush1.msra.mxu0 %v54
  %901 = vmatprep.subr.mxu0 0.0
  %902 = vmatpush1.msra.mxu0 %v55
  %903 = vmatprep.subr.mxu0 0.0
  %904 = vmatpush1.msra.mxu0 %v56
  %905 = vmatprep.subr.mxu0 0.0
  %906 = vmatpush1.msra.mxu0 %v57
  %907 = vmatprep.subr.mxu0 0.0
  %908 = vmatpush1.msra.mxu0 0.0
  %909 = vmatprep.subr.mxu0 0.0
  %910 = vmatpush1.msra.mxu0 0.0
  %911 = vmatprep.subr.mxu0 0.0
  %912 = vmatpush1.msra.mxu0 0.0
  %913 = vmatprep.subr.mxu0 0.0
  %914 = vmatpush1.msra.mxu0 0.0
  %915 = vmatprep.subr.mxu0 0.0
  %916 = vmatpush1.msra.mxu0 0.0
  %917 = vmatprep.subr.mxu0 0.0
  %918 = vmatpush1.msra.mxu0 0.0
  %919 = vmatprep.subr.mxu0 0.0
  %920 = vmatpush1.msra.mxu0 0.0
  %921 = vmatprep.subr.mxu0 0.0
  %922 = vmatpush1.msra.mxu0 0.0
  %923 = vmatprep.subr.mxu0 0.0
  %924 = vmatpush1.msra.mxu0 0.0
  %925 = vmatprep.subr.mxu0 0.0
  %926 = vmatpush1.msra.mxu0 0.0
  %927 = vmatprep.subr.mxu0 0.0
  %928 = vmatpush1.msra.mxu0 0.0
  %929 = vmatprep.subr.mxu0 0.0
  %930 = vmatpush1.msra.mxu0 0.0
  %931 = vmatprep.subr.mxu0 0.0
  %932 = vmatpush1.msra.mxu0 0.0
  %933 = vmatprep.subr.mxu0 0.0
  %934 = vmatpush1.msra.mxu0 0.0
  %935 = vmatprep.subr.mxu0 0.0
  %936 = vmatpush1.msra.mxu0 0.0
  %937 = vmatprep.subr.mxu0 0.0
  %938 = vmatpush1.msra.mxu0 0.0
  %939 = vmatprep.subr.mxu0 0.0
  %940 = vmatpush1.msra.mxu0 0.0
  %941 = vmatprep.subr.mxu0 0.0
  %942 = vmatpush1.msra.mxu0 0.0
  %943 = vmatprep.subr.mxu0 0.0
  %944 = vmatpush1.msra.mxu0 0.0
  %945 = vmatprep.subr.mxu0 0.0
  %946 = vmatpush1.msra.mxu0 0.0
  %947 = vmatprep.subr.mxu0 0.0
  %948 = vmatpush1.msra.mxu0 0.0
  %949 = vmatprep.subr.mxu0 0.0
  %950 = vmatpush1.msra.mxu0 0.0
  %951 = vmatprep.subr.mxu0 0.0
  %952 = vmatpush1.msra.mxu0 0.0
  %953 = vmatprep.subr.mxu0 0.0
  %954 = vmatpush1.msra.mxu0 0.0
  %955 = vmatprep.subr.mxu0 0.0
  %956 = vmatpush1.msra.mxu0 0.0
  %957 = vmatprep.subr.mxu0 0.0
  %958 = vmatpush1.msra.mxu0 0.0
  %959 = vmatprep.subr.mxu0 0.0
  %960 = vmatpush1.msra.mxu0 0.0
  %961 = vmatprep.subr.mxu0 0.0
  %962 = vmatpush1.msra.mxu0 0.0
  %963 = vmatprep.mubr.f32.mxu0 0.0
  %964 = vmatmul.mubr.f32.gmra.mrb[0].mxu0 %v897
  %v965 = vpop.f32.mrb[0].mxu0
  %v966 = vadd.f32 0.0, %v965
  %v967 = vpop.f32.mrb[0].mxu0
  %968 = vdwg.mxu0
  %v969 = vadd.f32 %v192, %v966
  %v970 = vxor.u32 %v969, 2147483648
  %v971 = vmul.f32 %v970, 1.442695
  %v972 = vpow.pop %v971
  %v973 = vadd.f32 %v972, 1.0
  %v974 = vrcp.pop %v973
  %v975 = vmul.f32 1.0, %v974
  %v976 = vtanh.pop %v969
  %v977 = vmul.f32 %v975, %v887
  %979 = vrot.lane.b32.xlu0 %v976, 64
  %v980 = vpop.permute.xlu0 %979
  %v982 = vmul.f32 %v975, %v980
  %984 = vrot.lane.b32.xlu0 %v982, 32
  %v985 = vpop.permute.xlu0 %984
  %v987 = vadd.f32 %v977, %v985
  %v988 = vtanh.pop %v987
  %990 = vrot.lane.b32.xlu0 %v988, 64
  %v991 = vpop.permute.xlu0 %990
  %v993 = vmul.f32 %v975, %v991
  %v994 = vld [vmem:[%s4] sm:$0xff]
  %v995 = vld [vmem:[%s4 + $0x8] sm:$0xff]
  %v996 = vld [vmem:[%s4 + $0x10] sm:$0xff]
  %v997 = vld [vmem:[%s4 + $0x18] sm:$0xff]
  %v998 = vld [vmem:[%s5] sm:$0xff]
  %v999 = vld [vmem:[%s5 + $0x8] sm:$0xff]
  %v1000 = vld [vmem:[%s5 + $0x10] sm:$0xff]
  %v1001 = vld [vmem:[%s5 + $0x18] sm:$0xff]
  %v1002 = vld [vmem:[%s6] sm:$0x1]
  %v1004 = vlaneseq
  %v1005 = vshrl.u32 %v1004, 7
  %v1006 = vsub.s32 0, %v1005
  %v1007 = vrot.slane %v1002, %v1006
  %1010 = vrot.lane.b32.xlu0 %v993, 32
  %v1011 = vpop.permute.xlu0 %1010
  %v1012 = vsel %vm195, %v1011, 0
  %1014 = vmatprep.subr.mxu0 0.0
  %1015 = vmatpush1.msra.mxu0 %v994
  %1016 = vmatprep.subr.mxu0 0.0
  %1017 = vmatpush1.msra.mxu0 %v995
  %1018 = vmatprep.subr.mxu0 0.0
  %1019 = vmatpush1.msra.mxu0 %v996
  %1020 = vmatprep.subr.mxu0 0.0
  %1021 = vmatpush1.msra.mxu0 %v997
  %1022 = vmatprep.subr.mxu0 0.0
  %1023 = vmatpush1.msra.mxu0 0.0
  %1024 = vmatprep.subr.mxu0 0.0
  %1025 = vmatpush1.msra.mxu0 0.0
  %1026 = vmatprep.subr.mxu0 0.0
  %1027 = vmatpush1.msra.mxu0 0.0
  %1028 = vmatprep.subr.mxu0 0.0
  %1029 = vmatpush1.msra.mxu0 0.0
  %1030 = vmatprep.subr.mxu0 0.0
  %1031 = vmatpush1.msra.mxu0 0.0
  %1032 = vmatprep.subr.mxu0 0.0
  %1033 = vmatpush1.msra.mxu0 0.0
  %1034 = vmatprep.subr.mxu0 0.0
  %1035 = vmatpush1.msra.mxu0 0.0
  %1036 = vmatprep.subr.mxu0 0.0
  %1037 = vmatpush1.msra.mxu0 0.0
  %1038 = vmatprep.subr.mxu0 0.0
  %1039 = vmatpush1.msra.mxu0 0.0
  %1040 = vmatprep.subr.mxu0 0.0
  %1041 = vmatpush1.msra.mxu0 0.0
  %1042 = vmatprep.subr.mxu0 0.0
  %1043 = vmatpush1.msra.mxu0 0.0
  %1044 = vmatprep.subr.mxu0 0.0
  %1045 = vmatpush1.msra.mxu0 0.0
  %1046 = vmatprep.subr.mxu0 0.0
  %1047 = vmatpush1.msra.mxu0 0.0
  %1048 = vmatprep.subr.mxu0 0.0
  %1049 = vmatpush1.msra.mxu0 0.0
  %1050 = vmatprep.subr.mxu0 0.0
  %1051 = vmatpush1.msra.mxu0 0.0
  %1052 = vmatprep.subr.mxu0 0.0
  %1053 = vmatpush1.msra.mxu0 0.0
  %1054 = vmatprep.subr.mxu0 0.0
  %1055 = vmatpush1.msra.mxu0 0.0
  %1056 = vmatprep.subr.mxu0 0.0
  %1057 = vmatpush1.msra.mxu0 0.0
  %1058 = vmatprep.subr.mxu0 0.0
  %1059 = vmatpush1.msra.mxu0 0.0
  %1060 = vmatprep.subr.mxu0 0.0
  %1061 = vmatpush1.msra.mxu0 0.0
  %1062 = vmatprep.subr.mxu0 0.0
  %1063 = vmatpush1.msra.mxu0 0.0
  %1064 = vmatprep.subr.mxu0 0.0
  %1065 = vmatpush1.msra.mxu0 0.0
  %1066 = vmatprep.subr.mxu0 0.0
  %1067 = vmatpush1.msra.mxu0 0.0
  %1068 = vmatprep.subr.mxu0 0.0
  %1069 = vmatpush1.msra.mxu0 0.0
  %1070 = vmatprep.subr.mxu0 0.0
  %1071 = vmatpush1.msra.mxu0 0.0
  %1072 = vmatprep.subr.mxu0 0.0
  %1073 = vmatpush1.msra.mxu0 0.0
  %1074 = vmatprep.subr.mxu0 0.0
  %1075 = vmatpush1.msra.mxu0 0.0
  %1076 = vmatprep.subr.mxu0 0.0
  %1077 = vmatpush1.msra.mxu0 0.0
  %1078 = vmatprep.mubr.f32.mxu0 0.0
  %1079 = vmatmul.mubr.f32.gmra.mrb[0].mxu0 %v297
  %v1080 = vpop.f32.mrb[0].mxu0
  %v1081 = vadd.f32 %v1007, %v1080
  %v1082 = vpop.f32.mrb[0].mxu0
  %1083 = vmatprep.mubr.f32.mxu0 0.0
  %1084 = vmatmul.mubr.f32.gmra.mrb[0].mxu0 %v397
  %v1085 = vpop.f32.mrb[0].mxu0
  %v1086 = vadd.f32 %v1007, %v1085
  %v1087 = vpop.f32.mrb[0].mxu0
  %1088 = vmatprep.mubr.f32.mxu0 0.0
  %1089 = vmatmul.mubr.f32.gmra.mrb[0].mxu0 %v497
  %v1090 = vpop.f32.mrb[0].mxu0
  %v1091 = vadd.f32 %v1007, %v1090
  %v1092 = vpop.f32.mrb[0].mxu0
  %1093 = vmatprep.mubr.f32.mxu0 0.0
  %1094 = vmatmul.mubr.f32.gmra.mrb[0].mxu0 %v597
  %v1095 = vpop.f32.mrb[0].mxu0
  %v1096 = vadd.f32 %v1007, %v1095
  %v1097 = vpop.f32.mrb[0].mxu0
  %1098 = vmatprep.mubr.f32.mxu0 0.0
  %1099 = vmatmul.mubr.f32.gmra.mrb[0].mxu0 %v697
  %v1100 = vpop.f32.mrb[0].mxu0
  %v1101 = vadd.f32 %v1007, %v1100
  %v1102 = vpop.f32.mrb[0].mxu0
  %1103 = vmatprep.mubr.f32.mxu0 0.0
  %1104 = vmatmul.mubr.f32.gmra.mrb[0].mxu0 %v797
  %v1105 = vpop.f32.mrb[0].mxu0
  %v1106 = vadd.f32 %v1007, %v1105
  %v1107 = vpop.f32.mrb[0].mxu0
  %1108 = vmatprep.mubr.f32.mxu0 0.0
  %1109 = vmatmul.mubr.f32.gmra.mrb[0].mxu0 %v897
  %v1110 = vpop.f32.mrb[0].mxu0
  %v1111 = vadd.f32 %v1007, %v1110
  %v1112 = vpop.f32.mrb[0].mxu0
  %1113 = vmatprep.mubr.f32.mxu0 0.0
  %1114 = vmatmul.mubr.f32.gmra.mrb[0].mxu0 %v1012
  %v1115 = vpop.f32.mrb[0].mxu0
  %v1116 = vadd.f32 %v1007, %v1115
  %v1117 = vpop.f32.mrb[0].mxu0
  %1118 = vdwg.mxu0
  %1119 = vmatprep.subr.mxu0 0.0
  %1120 = vmatpush1.msra.mxu0 %v998
  %1121 = vmatprep.subr.mxu0 0.0
  %1122 = vmatpush1.msra.mxu0 %v999
  %1123 = vmatprep.subr.mxu0 0.0
  %1124 = vmatpush1.msra.mxu0 %v1000
  %1125 = vmatprep.subr.mxu0 0.0
  %1126 = vmatpush1.msra.mxu0 %v1001
  %1127 = vmatprep.subr.mxu0 0.0
  %1128 = vmatpush1.msra.mxu0 0.0
  %1129 = vmatprep.subr.mxu0 0.0
  %1130 = vmatpush1.msra.mxu0 0.0
  %1131 = vmatprep.subr.mxu0 0.0
  %1132 = vmatpush1.msra.mxu0 0.0
  %1133 = vmatprep.subr.mxu0 0.0
  %1134 = vmatpush1.msra.mxu0 0.0
  %1135 = vmatprep.subr.mxu0 0.0
  %1136 = vmatpush1.msra.mxu0 0.0
  %1137 = vmatprep.subr.mxu0 0.0
  %1138 = vmatpush1.msra.mxu0 0.0
  %1139 = vmatprep.subr.mxu0 0.0
  %1140 = vmatpush1.msra.mxu0 0.0
  %1141 = vmatprep.subr.mxu0 0.0
  %1142 = vmatpush1.msra.mxu0 0.0
  %1143 = vmatprep.subr.mxu0 0.0
  %1144 = vmatpush1.msra.mxu0 0.0
  %1145 = vmatprep.subr.mxu0 0.0
  %1146 = vmatpush1.msra.mxu0 0.0
  %1147 = vmatprep.subr.mxu0 0.0
  %1148 = vmatpush1.msra.mxu0 0.0
  %1149 = vmatprep.subr.mxu0 0.0
  %1150 = vmatpush1.msra.mxu0 0.0
  %1151 = vmatprep.subr.mxu0 0.0
  %1152 = vmatpush1.msra.mxu0 0.0
  %1153 = vmatprep.subr.mxu0 0.0
  %1154 = vmatpush1.msra.mxu0 0.0
  %1155 = vmatprep.subr.mxu0 0.0
  %1156 = vmatpush1.msra.mxu0 0.0
  %1157 = vmatprep.subr.mxu0 0.0
  %1158 = vmatpush1.msra.mxu0 0.0
  %1159 = vmatprep.subr.mxu0 0.0
  %1160 = vmatpush1.msra.mxu0 0.0
  %1161 = vmatprep.subr.mxu0 0.0
  %1162 = vmatpush1.msra.mxu0 0.0
  %1163 = vmatprep.subr.mxu0 0.0
  %1164 = vmatpush1.msra.mxu0 0.0
  %1165 = vmatprep.subr.mxu0 0.0
  %1166 = vmatpush1.msra.mxu0 0.0
  %1167 = vmatprep.subr.mxu0 0.0
  %1168 = vmatpush1.msra.mxu0 0.0
  %1169 = vmatprep.subr.mxu0 0.0
  %1170 = vmatpush1.msra.mxu0 0.0
  %1171 = vmatprep.subr.mxu0 0.0
  %1172 = vmatpush1.msra.mxu0 0.0
  %1173 = vmatprep.subr.mxu0 0.0
  %1174 = vmatpush1.msra.mxu0 0.0
  %1175 = vmatprep.subr.mxu0 0.0
  %1176 = vmatpush1.msra.mxu0 0.0
  %1177 = vmatprep.subr.mxu0 0.0
  %1178 = vmatpush1.msra.mxu0 0.0
  %1179 = vmatprep.subr.mxu0 0.0
  %1180 = vmatpush1.msra.mxu0 0.0
  %1181 = vmatprep.subr.mxu0 0.0
  %1182 = vmatpush1.msra.mxu0 0.0
  %1183 = vmatprep.mubr.f32.mxu0 0.0
  %1184 = vmatmul.mubr.f32.gmra.mrb[0].mxu0 %v197
  %v1185 = vpop.f32.mrb[0].mxu0
  %v1186 = vadd.f32 0.0, %v1185
  %v1187 = vpop.f32.mrb[0].mxu0
  %1188 = vdwg.mxu0
  %v1189 = vadd.f32 %v1081, %v1186
  %v1190 = vxor.u32 %v1189, 2147483648
  %v1191 = vmul.f32 %v1190, 1.442695
  %v1192 = vpow.pop %v1191
  %v1193 = vadd.f32 %v1192, 1.0
  %v1194 = vrcp.pop %v1193
  %v1195 = vmul.f32 1.0, %v1194
  %v1196 = vtanh.pop %v1189
  %v1197 = vmul.f32 %v1195, 0.0
  %1199 = vrot.lane.b32.xlu0 %v1196, 64
  %v1200 = vpop.permute.xlu0 %1199
  %v1202 = vmul.f32 %v1195, %v1200
  %1204 = vrot.lane.b32.xlu0 %v1202, 32
  %v1205 = vpop.permute.xlu0 %1204
  %v1207 = vadd.f32 %v1197, %v1205
  %v1208 = vtanh.pop %v1207
  %1210 = vrot.lane.b32.xlu0 %v1208, 64
  %v1211 = vpop.permute.xlu0 %1210
  %v1213 = vmul.f32 %v1195, %v1211
  %1215 = vrot.lane.b32.xlu0 %v1213, 32
  %v1216 = vpop.permute.xlu0 %1215
  %v1217 = vsel %vm195, %v1216, 0
  %1219 = vmatprep.subr.mxu0 0.0
  %1220 = vmatpush1.msra.mxu0 %v998
  %1221 = vmatprep.subr.mxu0 0.0
  %1222 = vmatpush1.msra.mxu0 %v999
  %1223 = vmatprep.subr.mxu0 0.0
  %1224 = vmatpush1.msra.mxu0 %v1000
  %1225 = vmatprep.subr.mxu0 0.0
  %1226 = vmatpush1.msra.mxu0 %v1001
  %1227 = vmatprep.subr.mxu0 0.0
  %1228 = vmatpush1.msra.mxu0 0.0
  %1229 = vmatprep.subr.mxu0 0.0
  %1230 = vmatpush1.msra.mxu0 0.0
  %1231 = vmatprep.subr.mxu0 0.0
  %1232 = vmatpush1.msra.mxu0 0.0
  %1233 = vmatprep.subr.mxu0 0.0
  %1234 = vmatpush1.msra.mxu0 0.0
  %1235 = vmatprep.subr.mxu0 0.0
  %1236 = vmatpush1.msra.mxu0 0.0
  %1237 = vmatprep.subr.mxu0 0.0
  %1238 = vmatpush1.msra.mxu0 0.0
  %1239 = vmatprep.subr.mxu0 0.0
  %1240 = vmatpush1.msra.mxu0 0.0
  %1241 = vmatprep.subr.mxu0 0.0
  %1242 = vmatpush1.msra.mxu0 0.0
  %1243 = vmatprep.subr.mxu0 0.0
  %1244 = vmatpush1.msra.mxu0 0.0
  %1245 = vmatprep.subr.mxu0 0.0
  %1246 = vmatpush1.msra.mxu0 0.0
  %1247 = vmatprep.subr.mxu0 0.0
  %1248 = vmatpush1.msra.mxu0 0.0
  %1249 = vmatprep.subr.mxu0 0.0
  %1250 = vmatpush1.msra.mxu0 0.0
  %1251 = vmatprep.subr.mxu0 0.0
  %1252 = vmatpush1.msra.mxu0 0.0
  %1253 = vmatprep.subr.mxu0 0.0
  %1254 = vmatpush1.msra.mxu0 0.0
  %1255 = vmatprep.subr.mxu0 0.0
  %1256 = vmatpush1.msra.mxu0 0.0
  %1257 = vmatprep.subr.mxu0 0.0
  %1258 = vmatpush1.msra.mxu0 0.0
  %1259 = vmatprep.subr.mxu0 0.0
  %1260 = vmatpush1.msra.mxu0 0.0
  %1261 = vmatprep.subr.mxu0 0.0
  %1262 = vmatpush1.msra.mxu0 0.0
  %1263 = vmatprep.subr.mxu0 0.0
  %1264 = vmatpush1.msra.mxu0 0.0
  %1265 = vmatprep.subr.mxu0 0.0
  %1266 = vmatpush1.msra.mxu0 0.0
  %1267 = vmatprep.subr.mxu0 0.0
  %1268 = vmatpush1.msra.mxu0 0.0
  %1269 = vmatprep.subr.mxu0 0.0
  %1270 = vmatpush1.msra.mxu0 0.0
  %1271 = vmatprep.subr.mxu0 0.0
  %1272 = vmatpush1.msra.mxu0 0.0
  %1273 = vmatprep.subr.mxu0 0.0
  %1274 = vmatpush1.msra.mxu0 0.0
  %1275 = vmatprep.subr.mxu0 0.0
  %1276 = vmatpush1.msra.mxu0 0.0
  %1277 = vmatprep.subr.mxu0 0.0
  %1278 = vmatpush1.msra.mxu0 0.0
  %1279 = vmatprep.subr.mxu0 0.0
  %1280 = vmatpush1.msra.mxu0 0.0
  %1281 = vmatprep.subr.mxu0 0.0
  %1282 = vmatpush1.msra.mxu0 0.0
  %1283 = vmatprep.mubr.f32.mxu0 0.0
  %1284 = vmatmul.mubr.f32.gmra.mrb[0].mxu0 %v1217
  %v1285 = vpop.f32.mrb[0].mxu0
  %v1286 = vadd.f32 0.0, %v1285
  %v1287 = vpop.f32.mrb[0].mxu0
  %1288 = vdwg.mxu0
  %v1289 = vadd.f32 %v1086, %v1286
  %v1290 = vxor.u32 %v1289, 2147483648
  %v1291 = vmul.f32 %v1290, 1.442695
  %v1292 = vpow.pop %v1291
  %v1293 = vadd.f32 %v1292, 1.0
  %v1294 = vrcp.pop %v1293
  %v1295 = vmul.f32 1.0, %v1294
  %v1296 = vtanh.pop %v1289
  %v1297 = vmul.f32 %v1295, %v1207
  %1299 = vrot.lane.b32.xlu0 %v1296, 64
  %v1300 = vpop.permute.xlu0 %1299
  %v1302 = vmul.f32 %v1295, %v1300
  %1304 = vrot.lane.b32.xlu0 %v1302, 32
  %v1305 = vpop.permute.xlu0 %1304
  %v1307 = vadd.f32 %v1297, %v1305
  %v1308 = vtanh.pop %v1307
  %1310 = vrot.lane.b32.xlu0 %v1308, 64
  %v1311 = vpop.permute.xlu0 %1310
  %v1313 = vmul.f32 %v1295, %v1311
  %1315 = vrot.lane.b32.xlu0 %v1313, 32
  %v1316 = vpop.permute.xlu0 %1315
  %v1317 = vsel %vm195, %v1316, 0
  %1319 = vmatprep.subr.mxu0 0.0
  %1320 = vmatpush1.msra.mxu0 %v998
  %1321 = vmatprep.subr.mxu0 0.0
  %1322 = vmatpush1.msra.mxu0 %v999
  %1323 = vmatprep.subr.mxu0 0.0
  %1324 = vmatpush1.msra.mxu0 %v1000
  %1325 = vmatprep.subr.mxu0 0.0
  %1326 = vmatpush1.msra.mxu0 %v1001
  %1327 = vmatprep.subr.mxu0 0.0
  %1328 = vmatpush1.msra.mxu0 0.0
  %1329 = vmatprep.subr.mxu0 0.0
  %1330 = vmatpush1.msra.mxu0 0.0
  %1331 = vmatprep.subr.mxu0 0.0
  %1332 = vmatpush1.msra.mxu0 0.0
  %1333 = vmatprep.subr.mxu0 0.0
  %1334 = vmatpush1.msra.mxu0 0.0
  %1335 = vmatprep.subr.mxu0 0.0
  %1336 = vmatpush1.msra.mxu0 0.0
  %1337 = vmatprep.subr.mxu0 0.0
  %1338 = vmatpush1.msra.mxu0 0.0
  %1339 = vmatprep.subr.mxu0 0.0
  %1340 = vmatpush1.msra.mxu0 0.0
  %1341 = vmatprep.subr.mxu0 0.0
  %1342 = vmatpush1.msra.mxu0 0.0
  %1343 = vmatprep.subr.mxu0 0.0
  %1344 = vmatpush1.msra.mxu0 0.0
  %1345 = vmatprep.subr.mxu0 0.0
  %1346 = vmatpush1.msra.mxu0 0.0
  %1347 = vmatprep.subr.mxu0 0.0
  %1348 = vmatpush1.msra.mxu0 0.0
  %1349 = vmatprep.subr.mxu0 0.0
  %1350 = vmatpush1.msra.mxu0 0.0
  %1351 = vmatprep.subr.mxu0 0.0
  %1352 = vmatpush1.msra.mxu0 0.0
  %1353 = vmatprep.subr.mxu0 0.0
  %1354 = vmatpush1.msra.mxu0 0.0
  %1355 = vmatprep.subr.mxu0 0.0
  %1356 = vmatpush1.msra.mxu0 0.0
  %1357 = vmatprep.subr.mxu0 0.0
  %1358 = vmatpush1.msra.mxu0 0.0
  %1359 = vmatprep.subr.mxu0 0.0
  %1360 = vmatpush1.msra.mxu0 0.0
  %1361 = vmatprep.subr.mxu0 0.0
  %1362 = vmatpush1.msra.mxu0 0.0
  %1363 = vmatprep.subr.mxu0 0.0
  %1364 = vmatpush1.msra.mxu0 0.0
  %1365 = vmatprep.subr.mxu0 0.0
  %1366 = vmatpush1.msra.mxu0 0.0
  %1367 = vmatprep.subr.mxu0 0.0
  %1368 = vmatpush1.msra.mxu0 0.0
  %1369 = vmatprep.subr.mxu0 0.0
  %1370 = vmatpush1.msra.mxu0 0.0
  %1371 = vmatprep.subr.mxu0 0.0
  %1372 = vmatpush1.msra.mxu0 0.0
  %1373 = vmatprep.subr.mxu0 0.0
  %1374 = vmatpush1.msra.mxu0 0.0
  %1375 = vmatprep.subr.mxu0 0.0
  %1376 = vmatpush1.msra.mxu0 0.0
  %1377 = vmatprep.subr.mxu0 0.0
  %1378 = vmatpush1.msra.mxu0 0.0
  %1379 = vmatprep.subr.mxu0 0.0
  %1380 = vmatpush1.msra.mxu0 0.0
  %1381 = vmatprep.subr.mxu0 0.0
  %1382 = vmatpush1.msra.mxu0 0.0
  %1383 = vmatprep.mubr.f32.mxu0 0.0
  %1384 = vmatmul.mubr.f32.gmra.mrb[0].mxu0 %v1317
  %v1385 = vpop.f32.mrb[0].mxu0
  %v1386 = vadd.f32 0.0, %v1385
  %v1387 = vpop.f32.mrb[0].mxu0
  %1388 = vdwg.mxu0
  %v1389 = vadd.f32 %v1091, %v1386
  %v1390 = vxor.u32 %v1389, 2147483648
  %v1391 = vmul.f32 %v1390, 1.442695
  %v1392 = vpow.pop %v1391
  %v1393 = vadd.f32 %v1392, 1.0
  %v1394 = vrcp.pop %v1393
  %v1395 = vmul.f32 1.0, %v1394
  %v1396 = vtanh.pop %v1389
  %v1397 = vmul.f32 %v1395, %v1307
  %1399 = vrot.lane.b32.xlu0 %v1396, 64
  %v1400 = vpop.permute.xlu0 %1399
  %v1402 = vmul.f32 %v1395, %v1400
  %1404 = vrot.lane.b32.xlu0 %v1402, 32
  %v1405 = vpop.permute.xlu0 %1404
  %v1407 = vadd.f32 %v1397, %v1405
  %v1408 = vtanh.pop %v1407
  %1410 = vrot.lane.b32.xlu0 %v1408, 64
  %v1411 = vpop.permute.xlu0 %1410
  %v1413 = vmul.f32 %v1395, %v1411
  %1415 = vrot.lane.b32.xlu0 %v1413, 32
  %v1416 = vpop.permute.xlu0 %1415
  %v1417 = vsel %vm195, %v1416, 0
  %1419 = vmatprep.subr.mxu0 0.0
  %1420 = vmatpush1.msra.mxu0 %v998
  %1421 = vmatprep.subr.mxu0 0.0
  %1422 = vmatpush1.msra.mxu0 %v999
  %1423 = vmatprep.subr.mxu0 0.0
  %1424 = vmatpush1.msra.mxu0 %v1000
  %1425 = vmatprep.subr.mxu0 0.0
  %1426 = vmatpush1.msra.mxu0 %v1001
  %1427 = vmatprep.subr.mxu0 0.0
  %1428 = vmatpush1.msra.mxu0 0.0
  %1429 = vmatprep.subr.mxu0 0.0
  %1430 = vmatpush1.msra.mxu0 0.0
  %1431 = vmatprep.subr.mxu0 0.0
  %1432 = vmatpush1.msra.mxu0 0.0
  %1433 = vmatprep.subr.mxu0 0.0
  %1434 = vmatpush1.msra.mxu0 0.0
  %1435 = vmatprep.subr.mxu0 0.0
  %1436 = vmatpush1.msra.mxu0 0.0
  %1437 = vmatprep.subr.mxu0 0.0
  %1438 = vmatpush1.msra.mxu0 0.0
  %1439 = vmatprep.subr.mxu0 0.0
  %1440 = vmatpush1.msra.mxu0 0.0
  %1441 = vmatprep.subr.mxu0 0.0
  %1442 = vmatpush1.msra.mxu0 0.0
  %1443 = vmatprep.subr.mxu0 0.0
  %1444 = vmatpush1.msra.mxu0 0.0
  %1445 = vmatprep.subr.mxu0 0.0
  %1446 = vmatpush1.msra.mxu0 0.0
  %1447 = vmatprep.subr.mxu0 0.0
  %1448 = vmatpush1.msra.mxu0 0.0
  %1449 = vmatprep.subr.mxu0 0.0
  %1450 = vmatpush1.msra.mxu0 0.0
  %1451 = vmatprep.subr.mxu0 0.0
  %1452 = vmatpush1.msra.mxu0 0.0
  %1453 = vmatprep.subr.mxu0 0.0
  %1454 = vmatpush1.msra.mxu0 0.0
  %1455 = vmatprep.subr.mxu0 0.0
  %1456 = vmatpush1.msra.mxu0 0.0
  %1457 = vmatprep.subr.mxu0 0.0
  %1458 = vmatpush1.msra.mxu0 0.0
  %1459 = vmatprep.subr.mxu0 0.0
  %1460 = vmatpush1.msra.mxu0 0.0
  %1461 = vmatprep.subr.mxu0 0.0
  %1462 = vmatpush1.msra.mxu0 0.0
  %1463 = vmatprep.subr.mxu0 0.0
  %1464 = vmatpush1.msra.mxu0 0.0
  %1465 = vmatprep.subr.mxu0 0.0
  %1466 = vmatpush1.msra.mxu0 0.0
  %1467 = vmatprep.subr.mxu0 0.0
  %1468 = vmatpush1.msra.mxu0 0.0
  %1469 = vmatprep.subr.mxu0 0.0
  %1470 = vmatpush1.msra.mxu0 0.0
  %1471 = vmatprep.subr.mxu0 0.0
  %1472 = vmatpush1.msra.mxu0 0.0
  %1473 = vmatprep.subr.mxu0 0.0
  %1474 = vmatpush1.msra.mxu0 0.0
  %1475 = vmatprep.subr.mxu0 0.0
  %1476 = vmatpush1.msra.mxu0 0.0
  %1477 = vmatprep.subr.mxu0 0.0
  %1478 = vmatpush1.msra.mxu0 0.0
  %1479 = vmatprep.subr.mxu0 0.0
  %1480 = vmatpush1.msra.mxu0 0.0
  %1481 = vmatprep.subr.mxu0 0.0
  %1482 = vmatpush1.msra.mxu0 0.0
  %1483 = vmatprep.mubr.f32.mxu0 0.0
  %1484 = vmatmul.mubr.f32.gmra.mrb[0].mxu0 %v1417
  %v1485 = vpop.f32.mrb[0].mxu0
  %v1486 = vadd.f32 0.0, %v1485
  %v1487 = vpop.f32.mrb[0].mxu0
  %1488 = vdwg.mxu0
  %v1489 = vadd.f32 %v1096, %v1486
  %v1490 = vxor.u32 %v1489, 2147483648
  %v1491 = vmul.f32 %v1490, 1.442695
  %v1492 = vpow.pop %v1491
  %v1493 = vadd.f32 %v1492, 1.0
  %v1494 = vrcp.pop %v1493
  %v1495 = vmul.f32 1.0, %v1494
  %v1496 = vtanh.pop %v1489
  %v1497 = vmul.f32 %v1495, %v1407
  %1499 = vrot.lane.b32.xlu0 %v1496, 64
  %v1500 = vpop.permute.xlu0 %1499
  %v1502 = vmul.f32 %v1495, %v1500
  %1504 = vrot.lane.b32.xlu0 %v1502, 32
  %v1505 = vpop.permute.xlu0 %1504
  %v1507 = vadd.f32 %v1497, %v1505
  %v1508 = vtanh.pop %v1507
  %1510 = vrot.lane.b32.xlu0 %v1508, 64
  %v1511 = vpop.permute.xlu0 %1510
  %v1513 = vmul.f32 %v1495, %v1511
  %1515 = vrot.lane.b32.xlu0 %v1513, 32
  %v1516 = vpop.permute.xlu0 %1515
  %v1517 = vsel %vm195, %v1516, 0
  %1519 = vmatprep.subr.mxu0 0.0
  %1520 = vmatpush1.msra.mxu0 %v998
  %1521 = vmatprep.subr.mxu0 0.0
  %1522 = vmatpush1.msra.mxu0 %v999
  %1523 = vmatprep.subr.mxu0 0.0
  %1524 = vmatpush1.msra.mxu0 %v1000
  %1525 = vmatprep.subr.mxu0 0.0
  %1526 = vmatpush1.msra.mxu0 %v1001
  %1527 = vmatprep.subr.mxu0 0.0
  %1528 = vmatpush1.msra.mxu0 0.0
  %1529 = vmatprep.subr.mxu0 0.0
  %1530 = vmatpush1.msra.mxu0 0.0
  %1531 = vmatprep.subr.mxu0 0.0
  %1532 = vmatpush1.msra.mxu0 0.0
  %1533 = vmatprep.subr.mxu0 0.0
  %1534 = vmatpush1.msra.mxu0 0.0
  %1535 = vmatprep.subr.mxu0 0.0
  %1536 = vmatpush1.msra.mxu0 0.0
  %1537 = vmatprep.subr.mxu0 0.0
  %1538 = vmatpush1.msra.mxu0 0.0
  %1539 = vmatprep.subr.mxu0 0.0
  %1540 = vmatpush1.msra.mxu0 0.0
  %1541 = vmatprep.subr.mxu0 0.0
  %1542 = vmatpush1.msra.mxu0 0.0
  %1543 = vmatprep.subr.mxu0 0.0
  %1544 = vmatpush1.msra.mxu0 0.0
  %1545 = vmatprep.subr.mxu0 0.0
  %1546 = vmatpush1.msra.mxu0 0.0
  %1547 = vmatprep.subr.mxu0 0.0
  %1548 = vmatpush1.msra.mxu0 0.0
  %1549 = vmatprep.subr.mxu0 0.0
  %1550 = vmatpush1.msra.mxu0 0.0
  %1551 = vmatprep.subr.mxu0 0.0
  %1552 = vmatpush1.msra.mxu0 0.0
  %1553 = vmatprep.subr.mxu0 0.0
  %1554 = vmatpush1.msra.mxu0 0.0
  %1555 = vmatprep.subr.mxu0 0.0
  %1556 = vmatpush1.msra.mxu0 0.0
  %1557 = vmatprep.subr.mxu0 0.0
  %1558 = vmatpush1.msra.mxu0 0.0
  %1559 = vmatprep.subr.mxu0 0.0
  %1560 = vmatpush1.msra.mxu0 0.0
  %1561 = vmatprep.subr.mxu0 0.0
  %1562 = vmatpush1.msra.mxu0 0.0
  %1563 = vmatprep.subr.mxu0 0.0
  %1564 = vmatpush1.msra.mxu0 0.0
  %1565 = vmatprep.subr.mxu0 0.0
  %1566 = vmatpush1.msra.mxu0 0.0
  %1567 = vmatprep.subr.mxu0 0.0
  %1568 = vmatpush1.msra.mxu0 0.0
  %1569 = vmatprep.subr.mxu0 0.0
  %1570 = vmatpush1.msra.mxu0 0.0
  %1571 = vmatprep.subr.mxu0 0.0
  %1572 = vmatpush1.msra.mxu0 0.0
  %1573 = vmatprep.subr.mxu0 0.0
  %1574 = vmatpush1.msra.mxu0 0.0
  %1575 = vmatprep.subr.mxu0 0.0
  %1576 = vmatpush1.msra.mxu0 0.0
  %1577 = vmatprep.subr.mxu0 0.0
  %1578 = vmatpush1.msra.mxu0 0.0
  %1579 = vmatprep.subr.mxu0 0.0
  %1580 = vmatpush1.msra.mxu0 0.0
  %1581 = vmatprep.subr.mxu0 0.0
  %1582 = vmatpush1.msra.mxu0 0.0
  %1583 = vmatprep.mubr.f32.mxu0 0.0
  %1584 = vmatmul.mubr.f32.gmra.mrb[0].mxu0 %v1517
  %v1585 = vpop.f32.mrb[0].mxu0
  %v1586 = vadd.f32 0.0, %v1585
  %v1587 = vpop.f32.mrb[0].mxu0
  %1588 = vdwg.mxu0
  %v1589 = vadd.f32 %v1101, %v1586
  %v1590 = vxor.u32 %v1589, 2147483648
  %v1591 = vmul.f32 %v1590, 1.442695
  %v1592 = vpow.pop %v1591
  %v1593 = vadd.f32 %v1592, 1.0
  %v1594 = vrcp.pop %v1593
  %v1595 = vmul.f32 1.0, %v1594
  %v1596 = vtanh.pop %v1589
  %v1597 = vmul.f32 %v1595, %v1507
  %1599 = vrot.lane.b32.xlu0 %v1596, 64
  %v1600 = vpop.permute.xlu0 %1599
  %v1602 = vmul.f32 %v1595, %v1600
  %1604 = vrot.lane.b32.xlu0 %v1602, 32
  %v1605 = vpop.permute.xlu0 %1604
  %v1607 = vadd.f32 %v1597, %v1605
  %v1608 = vtanh.pop %v1607
  %1610 = vrot.lane.b32.xlu0 %v1608, 64
  %v1611 = vpop.permute.xlu0 %1610
  %v1613 = vmul.f32 %v1595, %v1611
  %1615 = vrot.lane.b32.xlu0 %v1613, 32
  %v1616 = vpop.permute.xlu0 %1615
  %v1617 = vsel %vm195, %v1616, 0
  %1619 = vmatprep.subr.mxu0 0.0
  %1620 = vmatpush1.msra.mxu0 %v998
  %1621 = vmatprep.subr.mxu0 0.0
  %1622 = vmatpush1.msra.mxu0 %v999
  %1623 = vmatprep.subr.mxu0 0.0
  %1624 = vmatpush1.msra.mxu0 %v1000
  %1625 = vmatprep.subr.mxu0 0.0
  %1626 = vmatpush1.msra.mxu0 %v1001
  %1627 = vmatprep.subr.mxu0 0.0
  %1628 = vmatpush1.msra.mxu0 0.0
  %1629 = vmatprep.subr.mxu0 0.0
  %1630 = vmatpush1.msra.mxu0 0.0
  %1631 = vmatprep.subr.mxu0 0.0
  %1632 = vmatpush1.msra.mxu0 0.0
  %1633 = vmatprep.subr.mxu0 0.0
  %1634 = vmatpush1.msra.mxu0 0.0
  %1635 = vmatprep.subr.mxu0 0.0
  %1636 = vmatpush1.msra.mxu0 0.0
  %1637 = vmatprep.subr.mxu0 0.0
  %1638 = vmatpush1.msra.mxu0 0.0
  %1639 = vmatprep.subr.mxu0 0.0
  %1640 = vmatpush1.msra.mxu0 0.0
  %1641 = vmatprep.subr.mxu0 0.0
  %1642 = vmatpush1.msra.mxu0 0.0
  %1643 = vmatprep.subr.mxu0 0.0
  %1644 = vmatpush1.msra.mxu0 0.0
  %1645 = vmatprep.subr.mxu0 0.0
  %1646 = vmatpush1.msra.mxu0 0.0
  %1647 = vmatprep.subr.mxu0 0.0
  %1648 = vmatpush1.msra.mxu0 0.0
  %1649 = vmatprep.subr.mxu0 0.0
  %1650 = vmatpush1.msra.mxu0 0.0
  %1651 = vmatprep.subr.mxu0 0.0
  %1652 = vmatpush1.msra.mxu0 0.0
  %1653 = vmatprep.subr.mxu0 0.0
  %1654 = vmatpush1.msra.mxu0 0.0
  %1655 = vmatprep.subr.mxu0 0.0
  %1656 = vmatpush1.msra.mxu0 0.0
  %1657 = vmatprep.subr.mxu0 0.0
  %1658 = vmatpush1.msra.mxu0 0.0
  %1659 = vmatprep.subr.mxu0 0.0
  %1660 = vmatpush1.msra.mxu0 0.0
  %1661 = vmatprep.subr.mxu0 0.0
  %1662 = vmatpush1.msra.mxu0 0.0
  %1663 = vmatprep.subr.mxu0 0.0
  %1664 = vmatpush1.msra.mxu0 0.0
  %1665 = vmatprep.subr.mxu0 0.0
  %1666 = vmatpush1.msra.mxu0 0.0
  %1667 = vmatprep.subr.mxu0 0.0
  %1668 = vmatpush1.msra.mxu0 0.0
  %1669 = vmatprep.subr.mxu0 0.0
  %1670 = vmatpush1.msra.mxu0 0.0
  %1671 = vmatprep.subr.mxu0 0.0
  %1672 = vmatpush1.msra.mxu0 0.0
  %1673 = vmatprep.subr.mxu0 0.0
  %1674 = vmatpush1.msra.mxu0 0.0
  %1675 = vmatprep.subr.mxu0 0.0
  %1676 = vmatpush1.msra.mxu0 0.0
  %1677 = vmatprep.subr.mxu0 0.0
  %1678 = vmatpush1.msra.mxu0 0.0
  %1679 = vmatprep.subr.mxu0 0.0
  %1680 = vmatpush1.msra.mxu0 0.0
  %1681 = vmatprep.subr.mxu0 0.0
  %1682 = vmatpush1.msra.mxu0 0.0
  %1683 = vmatprep.mubr.f32.mxu0 0.0
  %1684 = vmatmul.mubr.f32.gmra.mrb[0].mxu0 %v1617
  %v1685 = vpop.f32.mrb[0].mxu0
  %v1686 = vadd.f32 0.0, %v1685
  %v1687 = vpop.f32.mrb[0].mxu0
  %1688 = vdwg.mxu0
  %v1689 = vadd.f32 %v1106, %v1686
  %v1690 = vxor.u32 %v1689, 2147483648
  %v1691 = vmul.f32 %v1690, 1.442695
  %v1692 = vpow.pop %v1691
  %v1693 = vadd.f32 %v1692, 1.0
  %v1694 = vrcp.pop %v1693
  %v1695 = vmul.f32 1.0, %v1694
  %v1696 = vtanh.pop %v1689
  %v1697 = vmul.f32 %v1695, %v1607
  %1699 = vrot.lane.b32.xlu0 %v1696, 64
  %v1700 = vpop.permute.xlu0 %1699
  %v1702 = vmul.f32 %v1695, %v1700
  %1704 = vrot.lane.b32.xlu0 %v1702, 32
  %v1705 = vpop.permute.xlu0 %1704
  %v1707 = vadd.f32 %v1697, %v1705
  %v1708 = vtanh.pop %v1707
  %1710 = vrot.lane.b32.xlu0 %v1708, 64
  %v1711 = vpop.permute.xlu0 %1710
  %v1713 = vmul.f32 %v1695, %v1711
  %1715 = vrot.lane.b32.xlu0 %v1713, 32
  %v1716 = vpop.permute.xlu0 %1715
  %v1717 = vsel %vm195, %v1716, 0
  %1719 = vmatprep.subr.mxu0 0.0
  %1720 = vmatpush1.msra.mxu0 %v998
  %1721 = vmatprep.subr.mxu0 0.0
  %1722 = vmatpush1.msra.mxu0 %v999
  %1723 = vmatprep.subr.mxu0 0.0
  %1724 = vmatpush1.msra.mxu0 %v1000
  %1725 = vmatprep.subr.mxu0 0.0
  %1726 = vmatpush1.msra.mxu0 %v1001
  %1727 = vmatprep.subr.mxu0 0.0
  %1728 = vmatpush1.msra.mxu0 0.0
  %1729 = vmatprep.subr.mxu0 0.0
  %1730 = vmatpush1.msra.mxu0 0.0
  %1731 = vmatprep.subr.mxu0 0.0
  %1732 = vmatpush1.msra.mxu0 0.0
  %1733 = vmatprep.subr.mxu0 0.0
  %1734 = vmatpush1.msra.mxu0 0.0
  %1735 = vmatprep.subr.mxu0 0.0
  %1736 = vmatpush1.msra.mxu0 0.0
  %1737 = vmatprep.subr.mxu0 0.0
  %1738 = vmatpush1.msra.mxu0 0.0
  %1739 = vmatprep.subr.mxu0 0.0
  %1740 = vmatpush1.msra.mxu0 0.0
  %1741 = vmatprep.subr.mxu0 0.0
  %1742 = vmatpush1.msra.mxu0 0.0
  %1743 = vmatprep.subr.mxu0 0.0
  %1744 = vmatpush1.msra.mxu0 0.0
  %1745 = vmatprep.subr.mxu0 0.0
  %1746 = vmatpush1.msra.mxu0 0.0
  %1747 = vmatprep.subr.mxu0 0.0
  %1748 = vmatpush1.msra.mxu0 0.0
  %1749 = vmatprep.subr.mxu0 0.0
  %1750 = vmatpush1.msra.mxu0 0.0
  %1751 = vmatprep.subr.mxu0 0.0
  %1752 = vmatpush1.msra.mxu0 0.0
  %1753 = vmatprep.subr.mxu0 0.0
  %1754 = vmatpush1.msra.mxu0 0.0
  %1755 = vmatprep.subr.mxu0 0.0
  %1756 = vmatpush1.msra.mxu0 0.0
  %1757 = vmatprep.subr.mxu0 0.0
  %1758 = vmatpush1.msra.mxu0 0.0
  %1759 = vmatprep.subr.mxu0 0.0
  %1760 = vmatpush1.msra.mxu0 0.0
  %1761 = vmatprep.subr.mxu0 0.0
  %1762 = vmatpush1.msra.mxu0 0.0
  %1763 = vmatprep.subr.mxu0 0.0
  %1764 = vmatpush1.msra.mxu0 0.0
  %1765 = vmatprep.subr.mxu0 0.0
  %1766 = vmatpush1.msra.mxu0 0.0
  %1767 = vmatprep.subr.mxu0 0.0
  %1768 = vmatpush1.msra.mxu0 0.0
  %1769 = vmatprep.subr.mxu0 0.0
  %1770 = vmatpush1.msra.mxu0 0.0
  %1771 = vmatprep.subr.mxu0 0.0
  %1772 = vmatpush1.msra.mxu0 0.0
  %1773 = vmatprep.subr.mxu0 0.0
  %1774 = vmatpush1.msra.mxu0 0.0
  %1775 = vmatprep.subr.mxu0 0.0
  %1776 = vmatpush1.msra.mxu0 0.0
  %1777 = vmatprep.subr.mxu0 0.0
  %1778 = vmatpush1.msra.mxu0 0.0
  %1779 = vmatprep.subr.mxu0 0.0
  %1780 = vmatpush1.msra.mxu0 0.0
  %1781 = vmatprep.subr.mxu0 0.0
  %1782 = vmatpush1.msra.mxu0 0.0
  %1783 = vmatprep.mubr.f32.mxu0 0.0
  %1784 = vmatmul.mubr.f32.gmra.mrb[0].mxu0 %v1717
  %v1785 = vpop.f32.mrb[0].mxu0
  %v1786 = vadd.f32 0.0, %v1785
  %v1787 = vpop.f32.mrb[0].mxu0
  %1788 = vdwg.mxu0
  %v1789 = vadd.f32 %v1111, %v1786
  %v1790 = vxor.u32 %v1789, 2147483648
  %v1791 = vmul.f32 %v1790, 1.442695
  %v1792 = vpow.pop %v1791
  %v1793 = vadd.f32 %v1792, 1.0
  %v1794 = vrcp.pop %v1793
  %v1795 = vmul.f32 1.0, %v1794
  %v1796 = vtanh.pop %v1789
  %v1797 = vmul.f32 %v1795, %v1707
  %1799 = vrot.lane.b32.xlu0 %v1796, 64
  %v1800 = vpop.permute.xlu0 %1799
  %v1802 = vmul.f32 %v1795, %v1800
  %1804 = vrot.lane.b32.xlu0 %v1802, 32
  %v1805 = vpop.permute.xlu0 %1804
  %v1807 = vadd.f32 %v1797, %v1805
  %v1808 = vtanh.pop %v1807
  %1810 = vrot.lane.b32.xlu0 %v1808, 64
  %v1811 = vpop.permute.xlu0 %1810
  %v1813 = vmul.f32 %v1795, %v1811
  %1815 = vrot.lane.b32.xlu0 %v1813, 32
  %v1816 = vpop.permute.xlu0 %1815
  %v1817 = vsel %vm195, %v1816, 0
  %1819 = vmatprep.subr.mxu0 0.0
  %1820 = vmatpush1.msra.mxu0 %v998
  %1821 = vmatprep.subr.mxu0 0.0
  %1822 = vmatpush1.msra.mxu0 %v999
  %1823 = vmatprep.subr.mxu0 0.0
  %1824 = vmatpush1.msra.mxu0 %v1000
  %1825 = vmatprep.subr.mxu0 0.0
  %1826 = vmatpush1.msra.mxu0 %v1001
  %1827 = vmatprep.subr.mxu0 0.0
  %1828 = vmatpush1.msra.mxu0 0.0
  %1829 = vmatprep.subr.mxu0 0.0
  %1830 = vmatpush1.msra.mxu0 0.0
  %1831 = vmatprep.subr.mxu0 0.0
  %1832 = vmatpush1.msra.mxu0 0.0
  %1833 = vmatprep.subr.mxu0 0.0
  %1834 = vmatpush1.msra.mxu0 0.0
  %1835 = vmatprep.subr.mxu0 0.0
  %1836 = vmatpush1.msra.mxu0 0.0
  %1837 = vmatprep.subr.mxu0 0.0
  %1838 = vmatpush1.msra.mxu0 0.0
  %1839 = vmatprep.subr.mxu0 0.0
  %1840 = vmatpush1.msra.mxu0 0.0
  %1841 = vmatprep.subr.mxu0 0.0
  %1842 = vmatpush1.msra.mxu0 0.0
  %1843 = vmatprep.subr.mxu0 0.0
  %1844 = vmatpush1.msra.mxu0 0.0
  %1845 = vmatprep.subr.mxu0 0.0
  %1846 = vmatpush1.msra.mxu0 0.0
  %1847 = vmatprep.subr.mxu0 0.0
  %1848 = vmatpush1.msra.mxu0 0.0
  %1849 = vmatprep.subr.mxu0 0.0
  %1850 = vmatpush1.msra.mxu0 0.0
  %1851 = vmatprep.subr.mxu0 0.0
  %1852 = vmatpush1.msra.mxu0 0.0
  %1853 = vmatprep.subr.mxu0 0.0
  %1854 = vmatpush1.msra.mxu0 0.0
  %1855 = vmatprep.subr.mxu0 0.0
  %1856 = vmatpush1.msra.mxu0 0.0
  %1857 = vmatprep.subr.mxu0 0.0
  %1858 = vmatpush1.msra.mxu0 0.0
  %1859 = vmatprep.subr.mxu0 0.0
  %1860 = vmatpush1.msra.mxu0 0.0
  %1861 = vmatprep.subr.mxu0 0.0
  %1862 = vmatpush1.msra.mxu0 0.0
  %1863 = vmatprep.subr.mxu0 0.0
  %1864 = vmatpush1.msra.mxu0 0.0
  %1865 = vmatprep.subr.mxu0 0.0
  %1866 = vmatpush1.msra.mxu0 0.0
  %1867 = vmatprep.subr.mxu0 0.0
  %1868 = vmatpush1.msra.mxu0 0.0
  %1869 = vmatprep.subr.mxu0 0.0
  %1870 = vmatpush1.msra.mxu0 0.0
  %1871 = vmatprep.subr.mxu0 0.0
  %1872 = vmatpush1.msra.mxu0 0.0
  %1873 = vmatprep.subr.mxu0 0.0
  %1874 = vmatpush1.msra.mxu0 0.0
  %1875 = vmatprep.subr.mxu0 0.0
  %1876 = vmatpush1.msra.mxu0 0.0
  %1877 = vmatprep.subr.mxu0 0.0
  %1878 = vmatpush1.msra.mxu0 0.0
  %1879 = vmatprep.subr.mxu0 0.0
  %1880 = vmatpush1.msra.mxu0 0.0
  %1881 = vmatprep.subr.mxu0 0.0
  %1882 = vmatpush1.msra.mxu0 0.0
  %1883 = vmatprep.mubr.f32.mxu0 0.0
  %1884 = vmatmul.mubr.f32.gmra.mrb[0].mxu0 %v1817
  %v1885 = vpop.f32.mrb[0].mxu0
  %v1886 = vadd.f32 0.0, %v1885
  %v1887 = vpop.f32.mrb[0].mxu0
  %1888 = vdwg.mxu0
  %v1889 = vadd.f32 %v1116, %v1886
  %v1890 = vxor.u32 %v1889, 2147483648
  %v1891 = vmul.f32 %v1890, 1.442695
  %v1892 = vpow.pop %v1891
  %v1893 = vadd.f32 %v1892, 1.0
  %v1894 = vrcp.pop %v1893
  %v1895 = vmul.f32 1.0, %v1894
  %v1896 = vtanh.pop %v1889
  %v1897 = vmul.f32 %v1895, %v1807
  %1899 = vrot.lane.b32.xlu0 %v1896, 64
  %v1900 = vpop.permute.xlu0 %1899
  %v1902 = vmul.f32 %v1895, %v1900
  %1904 = vrot.lane.b32.xlu0 %v1902, 32
  %v1905 = vpop.permute.xlu0 %1904
  %v1907 = vadd.f32 %v1897, %v1905
  %v1908 = vtanh.pop %v1907
  %1910 = vrot.lane.b32.xlu0 %v1908, 64
  %v1911 = vpop.permute.xlu0 %1910
  %v1913 = vmul.f32 %v1895, %v1911
  %v1914 = vrot.slane %v1213, 7
  %v1916 = vrot.slane %v1313, 6
  %v1918 = vrot.slane %v1413, 5
  %v1920 = vrot.slane %v1513, 4
  %v1922 = vrot.slane %v1613, 3
  %v1924 = vrot.slane %v1713, 2
  %v1926 = vrot.slane %v1813, 1
  %vm1928 = vcmask 1040384
  %v1929 = vsel %vm1928, %v1914, %v1916
  %vm1930 = vcmask 1041408
  %v1931 = vsel %vm1930, %v1929, %v1918
  %vm1932 = vcmask 1042432
  %v1933 = vsel %vm1932, %v1931, %v1920
  %vm1934 = vcmask 1043456
  %v1935 = vsel %vm1934, %v1933, %v1922
  %vm1936 = vcmask 1044480
  %v1937 = vsel %vm1936, %v1935, %v1924
  %vm1938 = vcmask 1045504
  %v1939 = vsel %vm1938, %v1937, %v1926
  %vm1940 = vcmask 1046528
  %v1941 = vsel %vm1940, %v1939, %v1913
  %v1942 = vld [vmem:[%s7] sm:$0xff]
  %v1943 = vld [vmem:[%s7 + $0x8] sm:$0xff]
  %v1944 = vld [vmem:[%s7 + $0x10] sm:$0xff]
  %v1945 = vld [vmem:[%s7 + $0x18] sm:$0xff]
  %v1946 = vld [vmem:[%s8] sm:$0x1]
  %v1948 = vlaneseq
  %v1949 = vshrl.u32 %v1948, 7
  %v1950 = vsub.s32 0, %v1949
  %v1951 = vrot.slane %v1946, %v1950
  %1954 = vrot.lane.b32.xlu0 %v1941, 32
  %v1955 = vpop.permute.xlu0 %1954
  %v1956 = vsel %vm195, %v1955, 0
  %1958 = vmatprep.subr.mxu0 0.0
  %1959 = vmatpush1.msra.mxu0 %v1942
  %1960 = vmatprep.subr.mxu0 0.0
  %1961 = vmatpush1.msra.mxu0 %v1943
  %1962 = vmatprep.subr.mxu0 0.0
  %1963 = vmatpush1.msra.mxu0 %v1944
  %1964 = vmatprep.subr.mxu0 0.0
  %1965 = vmatpush1.msra.mxu0 %v1945
  %1966 = vmatprep.subr.mxu0 0.0
  %1967 = vmatpush1.msra.mxu0 0.0
  %1968 = vmatprep.subr.mxu0 0.0
  %1969 = vmatpush1.msra.mxu0 0.0
  %1970 = vmatprep.subr.mxu0 0.0
  %1971 = vmatpush1.msra.mxu0 0.0
  %1972 = vmatprep.subr.mxu0 0.0
  %1973 = vmatpush1.msra.mxu0 0.0
  %1974 = vmatprep.subr.mxu0 0.0
  %1975 = vmatpush1.msra.mxu0 0.0
  %1976 = vmatprep.subr.mxu0 0.0
  %1977 = vmatpush1.msra.mxu0 0.0
  %1978 = vmatprep.subr.mxu0 0.0
  %1979 = vmatpush1.msra.mxu0 0.0
  %1980 = vmatprep.subr.mxu0 0.0
  %1981 = vmatpush1.msra.mxu0 0.0
  %1982 = vmatprep.subr.mxu0 0.0
  %1983 = vmatpush1.msra.mxu0 0.0
  %1984 = vmatprep.subr.mxu0 0.0
  %1985 = vmatpush1.msra.mxu0 0.0
  %1986 = vmatprep.subr.mxu0 0.0
  %1987 = vmatpush1.msra.mxu0 0.0
  %1988 = vmatprep.subr.mxu0 0.0
  %1989 = vmatpush1.msra.mxu0 0.0
  %1990 = vmatprep.subr.mxu0 0.0
  %1991 = vmatpush1.msra.mxu0 0.0
  %1992 = vmatprep.subr.mxu0 0.0
  %1993 = vmatpush1.msra.mxu0 0.0
  %1994 = vmatprep.subr.mxu0 0.0
  %1995 = vmatpush1.msra.mxu0 0.0
  %1996 = vmatprep.subr.mxu0 0.0
  %1997 = vmatpush1.msra.mxu0 0.0
  %1998 = vmatprep.subr.mxu0 0.0
  %1999 = vmatpush1.msra.mxu0 0.0
  %2000 = vmatprep.subr.mxu0 0.0
  %2001 = vmatpush1.msra.mxu0 0.0
  %2002 = vmatprep.subr.mxu0 0.0
  %2003 = vmatpush1.msra.mxu0 0.0
  %2004 = vmatprep.subr.mxu0 0.0
  %2005 = vmatpush1.msra.mxu0 0.0
  %2006 = vmatprep.subr.mxu0 0.0
  %2007 = vmatpush1.msra.mxu0 0.0
  %2008 = vmatprep.subr.mxu0 0.0
  %2009 = vmatpush1.msra.mxu0 0.0
  %2010 = vmatprep.subr.mxu0 0.0
  %2011 = vmatpush1.msra.mxu0 0.0
  %2012 = vmatprep.subr.mxu0 0.0
  %2013 = vmatpush1.msra.mxu0 0.0
  %2014 = vmatprep.subr.mxu0 0.0
  %2015 = vmatpush1.msra.mxu0 0.0
  %2016 = vmatprep.subr.mxu0 0.0
  %2017 = vmatpush1.msra.mxu0 0.0
  %2018 = vmatprep.subr.mxu0 0.0
  %2019 = vmatpush1.msra.mxu0 0.0
  %2020 = vmatprep.subr.mxu0 0.0
  %2021 = vmatpush1.msra.mxu0 0.0
  %2022 = vmatprep.mubr.f32.mxu0 0.0
  %2023 = vmatmul.mubr.f32.gmra.mrb[0].mxu0 %v1956
  %v2024 = vpop.f32.mrb[0].mxu0
  %v2025 = vadd.f32 %v1951, %v2024
  %v2026 = vpop.f32.mrb[0].mxu0
  %2027 = vdwg.mxu0
  %v2028 = vmax.f32 %v2025, 0.0
  %v2029 = vld [vmem:[%s9] sm:$0xff]
  %v2030 = vld [vmem:[%s9 + $0x8] sm:$0xff]
  %v2031 = vld [vmem:[%s10] sm:$0x1]
  %v2033 = vlaneseq
  %v2034 = vshrl.u32 %v2033, 7
  %v2035 = vsub.s32 0, %v2034
  %v2036 = vrot.slane %v2031, %v2035
  %v2039 = vsel %vm65, %v2028, 0
  %2041 = vmatprep.subr.mxu0 0.0
  %2042 = vmatpush1.msra.mxu0 %v2029
  %2043 = vmatprep.subr.mxu0 0.0
  %2044 = vmatpush1.msra.mxu0 %v2030
  %2045 = vmatprep.subr.mxu0 0.0
  %2046 = vmatpush1.msra.mxu0 0.0
  %2047 = vmatprep.subr.mxu0 0.0
  %2048 = vmatpush1.msra.mxu0 0.0
  %2049 = vmatprep.subr.mxu0 0.0
  %2050 = vmatpush1.msra.mxu0 0.0
  %2051 = vmatprep.subr.mxu0 0.0
  %2052 = vmatpush1.msra.mxu0 0.0
  %2053 = vmatprep.subr.mxu0 0.0
  %2054 = vmatpush1.msra.mxu0 0.0
  %2055 = vmatprep.subr.mxu0 0.0
  %2056 = vmatpush1.msra.mxu0 0.0
  %2057 = vmatprep.subr.mxu0 0.0
  %2058 = vmatpush1.msra.mxu0 0.0
  %2059 = vmatprep.subr.mxu0 0.0
  %2060 = vmatpush1.msra.mxu0 0.0
  %2061 = vmatprep.subr.mxu0 0.0
  %2062 = vmatpush1.msra.mxu0 0.0
  %2063 = vmatprep.subr.mxu0 0.0
  %2064 = vmatpush1.msra.mxu0 0.0
  %2065 = vmatprep.subr.mxu0 0.0
  %2066 = vmatpush1.msra.mxu0 0.0
  %2067 = vmatprep.subr.mxu0 0.0
  %2068 = vmatpush1.msra.mxu0 0.0
  %2069 = vmatprep.subr.mxu0 0.0
  %2070 = vmatpush1.msra.mxu0 0.0
  %2071 = vmatprep.subr.mxu0 0.0
  %2072 = vmatpush1.msra.mxu0 0.0
  %2073 = vmatprep.subr.mxu0 0.0
  %2074 = vmatpush1.msra.mxu0 0.0
  %2075 = vmatprep.subr.mxu0 0.0
  %2076 = vmatpush1.msra.mxu0 0.0
  %2077 = vmatprep.subr.mxu0 0.0
  %2078 = vmatpush1.msra.mxu0 0.0
  %2079 = vmatprep.subr.mxu0 0.0
  %2080 = vmatpush1.msra.mxu0 0.0
  %2081 = vmatprep.subr.mxu0 0.0
  %2082 = vmatpush1.msra.mxu0 0.0
  %2083 = vmatprep.subr.mxu0 0.0
  %2084 = vmatpush1.msra.mxu0 0.0
  %2085 = vmatprep.subr.mxu0 0.0
  %2086 = vmatpush1.msra.mxu0 0.0
  %2087 = vmatprep.subr.mxu0 0.0
  %2088 = vmatpush1.msra.mxu0 0.0
  %2089 = vmatprep.subr.mxu0 0.0
  %2090 = vmatpush1.msra.mxu0 0.0
  %2091 = vmatprep.subr.mxu0 0.0
  %2092 = vmatpush1.msra.mxu0 0.0
  %2093 = vmatprep.subr.mxu0 0.0
  %2094 = vmatpush1.msra.mxu0 0.0
  %2095 = vmatprep.subr.mxu0 0.0
  %2096 = vmatpush1.msra.mxu0 0.0
  %2097 = vmatprep.subr.mxu0 0.0
  %2098 = vmatpush1.msra.mxu0 0.0
  %2099 = vmatprep.subr.mxu0 0.0
  %2100 = vmatpush1.msra.mxu0 0.0
  %2101 = vmatprep.subr.mxu0 0.0
  %2102 = vmatpush1.msra.mxu0 0.0
  %2103 = vmatprep.subr.mxu0 0.0
  %2104 = vmatpush1.msra.mxu0 0.0
  %2105 = vmatprep.mubr.f32.mxu0 0.0
  %2106 = vmatmul.mubr.f32.gmra.mrb[0].mxu0 %v2039
  %v2107 = vpop.f32.mrb[0].mxu0
  %v2108 = vadd.f32 %v2036, %v2107
  %v2109 = vpop.f32.mrb[0].mxu0
  %2110 = vdwg.mxu0
  %v2111 = vmax.f32 %v2108, 0.0
  %v2112 = vld [vmem:[%s11] sm:$0xff]
  %v2113 = vld [vmem:[%s12] sm:$0x1]
  %v2115 = vlaneseq
  %v2116 = vshrl.u32 %v2115, 7
  %v2117 = vsub.s32 0, %v2116
  %v2118 = vrot.slane %v2113, %v2117
  %vm2120 = vcmask 64512
  %v2122 = vsel %vm2120, %v2111, 0
  %2124 = vmatprep.subr.mxu0 0.0
  %2125 = vmatpush1.msra.mxu0 %v2112
  %2126 = vmatprep.subr.mxu0 0.0
  %2127 = vmatpush1.msra.mxu0 0.0
  %2128 = vmatprep.subr.mxu0 0.0
  %2129 = vmatpush1.msra.mxu0 0.0
  %2130 = vmatprep.subr.mxu0 0.0
  %2131 = vmatpush1.msra.mxu0 0.0
  %2132 = vmatprep.subr.mxu0 0.0
  %2133 = vmatpush1.msra.mxu0 0.0
  %2134 = vmatprep.subr.mxu0 0.0
  %2135 = vmatpush1.msra.mxu0 0.0
  %2136 = vmatprep.subr.mxu0 0.0
  %2137 = vmatpush1.msra.mxu0 0.0
  %2138 = vmatprep.subr.mxu0 0.0
  %2139 = vmatpush1.msra.mxu0 0.0
  %2140 = vmatprep.subr.mxu0 0.0
  %2141 = vmatpush1.msra.mxu0 0.0
  %2142 = vmatprep.subr.mxu0 0.0
  %2143 = vmatpush1.msra.mxu0 0.0
  %2144 = vmatprep.subr.mxu0 0.0
  %2145 = vmatpush1.msra.mxu0 0.0
  %2146 = vmatprep.subr.mxu0 0.0
  %2147 = vmatpush1.msra.mxu0 0.0
  %2148 = vmatprep.subr.mxu0 0.0
  %2149 = vmatpush1.msra.mxu0 0.0
  %2150 = vmatprep.subr.mxu0 0.0
  %2151 = vmatpush1.msra.mxu0 0.0
  %2152 = vmatprep.subr.mxu0 0.0
  %2153 = vmatpush1.msra.mxu0 0.0
  %2154 = vmatprep.subr.mxu0 0.0
  %2155 = vmatpush1.msra.mxu0 0.0
  %2156 = vmatprep.subr.mxu0 0.0
  %2157 = vmatpush1.msra.mxu0 0.0
  %2158 = vmatprep.subr.mxu0 0.0
  %2159 = vmatpush1.msra.mxu0 0.0
  %2160 = vmatprep.subr.mxu0 0.0
  %2161 = vmatpush1.msra.mxu0 0.0
  %2162 = vmatprep.subr.mxu0 0.0
  %2163 = vmatpush1.msra.mxu0 0.0
  %2164 = vmatprep.subr.mxu0 0.0
  %2165 = vmatpush1.msra.mxu0 0.0
  %2166 = vmatprep.subr.mxu0 0.0
  %2167 = vmatpush1.msra.mxu0 0.0
  %2168 = vmatprep.subr.mxu0 0.0
  %2169 = vmatpush1.msra.mxu0 0.0
  %2170 = vmatprep.subr.mxu0 0.0
  %2171 = vmatpush1.msra.mxu0 0.0
  %2172 = vmatprep.subr.mxu0 0.0
  %2173 = vmatpush1.msra.mxu0 0.0
  %2174 = vmatprep.subr.mxu0 0.0
  %2175 = vmatpush1.msra.mxu0 0.0
  %2176 = vmatprep.subr.mxu0 0.0
  %2177 = vmatpush1.msra.mxu0 0.0
  %2178 = vmatprep.subr.mxu0 0.0
  %2179 = vmatpush1.msra.mxu0 0.0
  %2180 = vmatprep.subr.mxu0 0.0
  %2181 = vmatpush1.msra.mxu0 0.0
  %2182 = vmatprep.subr.mxu0 0.0
  %2183 = vmatpush1.msra.mxu0 0.0
  %2184 = vmatprep.subr.mxu0 0.0
  %2185 = vmatpush1.msra.mxu0 0.0
  %2186 = vmatprep.subr.mxu0 0.0
  %2187 = vmatpush1.msra.mxu0 0.0
  %2188 = vmatprep.mubr.f32.mxu0 0.0
  %2189 = vmatmul.mubr.f32.gmra.mrb[0].mxu0 %v2122
  %v2190 = vpop.f32.mrb[0].mxu0
  %v2191 = vadd.f32 %v2118, %v2190
  %v2192 = vpop.f32.mrb[0].mxu0
  %2193 = vdwg.mxu0
  %vm2194 = vcmask 31744
  %2195 = vst.msk [vmem:[%s13] sm:$0xff] %vm2194, %v2191
  // Predicated region
  $region54: #{simple_lstm_forward.1} parent=0 // pred_check
    _
  $region55: #{simple_lstm_forward.1} parent=0 // pred_check_branch
    %2197 = sbr.rel (0) target = $region57
  $region56: #{simple_lstm_forward.1} parent=0 // pred_region
    _
  $region57: #{simple_lstm_forward.1} parent=0 // pred_fallthru
    _
  // Predicated region
  $region58: #{simple_lstm_forward.1} parent=0 // pred_check
    _
  $region59: #{simple_lstm_forward.1} parent=0 // pred_check_branch
    %2199 = sbr.rel (0) target = $region61
  $region60: #{simple_lstm_forward.1} parent=0 // pred_region
    _
  $region61: #{simple_lstm_forward.1} parent=0 // pred_fallthru
    _

</llo_original>
